<compile_context>
chip_gen: v7x
topology: tpu7x:2x2x1
jax: 0.10.0
libtpu: 0.0.40
codegen_flags: <defaults>
</compile_context>

<pallas_src>
import math

import jax
import jax.numpy as jnp
from jax.experimental import pallas as pl
from jax.experimental.pallas import tpu as pltpu


def make_resblock_kernel(TH, W, Cin, Cout, T, neg_slope=0.2):
    """One grid step computes TH output rows of one batch element."""

    def kernel(xs_ref, xt_ref, xb_ref, w1_ref, b1_ref, w2_ref, b2_ref, o_ref):
        # xs_ref : (1, Cin, TH, W)   main row strip (f32)
        # xt_ref : (1, Cin, 8,  W)   8-row block just above the strip (last 2 rows used)
        # xb_ref : (1, Cin, 8,  W)   8-row block just below the strip (first 2 rows used)
        # w1_ref : (Cout, 9*Cin)     conv1 weights, matmul-ready, bf16
        # b1_ref : (Cout, 1)         f32
        # w2_ref : (Cout, 9*Cout)    conv2 weights, matmul-ready, bf16
        # b2_ref : (Cout, 1)         f32
        # o_ref  : (1, Cout, TH*W)   lane-dense output block (f32)
        t = pl.program_id(1)
        xs = xs_ref[0]                                            # (Cin, TH, W)

        # ---- assemble zero-padded (Cin, TH+4, W+2) input strip (2-row halo) ----
        top2 = jnp.where(t > 0, xt_ref[0, :, 6:8, :], 0.0)        # rows t*TH-2, t*TH-1
        bot2 = jnp.where(t < T - 1, xb_ref[0, :, 0:2, :], 0.0)    # rows t*TH+TH, +TH+1
        rows = jnp.concatenate([top2, xs, bot2], axis=1)          # (Cin, TH+4, W)
        zc_in = jnp.zeros((Cin, TH + 4, 1), jnp.float32)
        xpad = jnp.concatenate([zc_in, rows, zc_in], axis=2)      # (Cin, TH+4, W+2)

        # ---- conv1 over TH+2 rows: single im2col matmul, bf16 in / f32 acc ----
        L1 = (TH + 2) * W
        p1 = jnp.concatenate(
            [xpad[:, dh:dh + TH + 2, dw:dw + W].reshape(Cin, L1)
             for dh in range(3) for dw in range(3)], axis=0)      # (9*Cin, L1)
        h1 = jnp.dot(w1_ref[...], p1.astype(jnp.bfloat16),
                     preferred_element_type=jnp.float32) + b1_ref[...]
        h1 = jnp.where(h1 > 0, h1, neg_slope * h1)                # LeakyReLU(0.2)

        # ---- zero phantom conv1 rows at the image top/bottom (conv2 zero-pads) ----
        h1 = h1.reshape(Cout, TH + 2, W)
        r = jax.lax.broadcasted_iota(jnp.int32, (Cout, TH + 2, W), 1)
        h1 = jnp.where(jnp.logical_and(r == 0, t == 0), 0.0, h1)
        h1 = jnp.where(jnp.logical_and(r == TH + 1, t == T - 1), 0.0, h1)

        # ---- conv2 over the TH output rows: single im2col matmul ----
        zc_mid = jnp.zeros((Cout, TH + 2, 1), jnp.float32)
        h1p = jnp.concatenate([zc_mid, h1, zc_mid], axis=2)       # (Cout, TH+2, W+2)
        L2 = TH * W
        p2 = jnp.concatenate(
            [h1p[:, dh:dh + TH, dw:dw + W].reshape(Cout, L2)
             for dh in range(3) for dw in range(3)], axis=0)      # (9*Cout, L2)
        h2 = jnp.dot(w2_ref[...], p2.astype(jnp.bfloat16),
                     preferred_element_type=jnp.float32) + b2_ref[...]

        # ---- residual add + lane-dense store ----
        o_ref[0] = h2 + xs.reshape(Cin, L2)

    return kernel


def _pick_tile_rows(H, W, Cin, Cout, budget_bytes=8 << 20):
    """Largest 8-aligned divisor of H whose per-tile working set fits the budget;
    prefer >= 2 row tiles (pipelining slack / two v7x TensorCores)."""
    cands = [th for th in range(8, H + 1, 8) if H % th == 0]

    def cost(th):  # rough f32 working set per tile
        return 4 * ((th + 4) * (W + 2) * Cin + 9 * Cin * (th + 2) * W
                    + (th + 2) * (W + 2) * Cout + 9 * Cout * th * W
                    + 2 * th * W * Cout)

    fitting = [th for th in cands if cost(th) <= budget_bytes] or [cands[0]]
    th = fitting[-1]
    if th == H and len(fitting) > 1:
        th = fitting[-2]
    return th


def res_block_sr(x, w1, b1, w2, b2):
    """x: (N, Cin, H, W); w*: (Cout, Cin, 3, 3) PyTorch OIHW; b*: (Cout,)."""
    N, Cin, H, W = x.shape
    Cout = w1.shape[0]
    assert Cin == Cout, "residual add requires inchannel == outchannel"
    # TODO(synk): support H not a multiple of 8 via a masked remainder row tile.
    assert H % 8 == 0, "this kernel assumes H is a multiple of 8"

    TH = _pick_tile_rows(H, W, Cin, Cout)
    T = H // TH
    m = TH // 8          # main-tile size in units of 8-row halo blocks
    HB = H // 8          # number of 8-row halo blocks along H

    x = x.astype(jnp.float32)
    # OIHW -> (Cout, 3, 3, Cin) -> (Cout, 9*Cin): matmul-ready, bf16 for the MXU.
    w1m = jnp.transpose(w1, (0, 2, 3, 1)).reshape(Cout, 9 * Cin).astype(jnp.bfloat16)
    w2m = jnp.transpose(w2, (0, 2, 3, 1)).reshape(Cout, 9 * Cout).astype(jnp.bfloat16)
    b1c = b1.reshape(Cout, 1).astype(jnp.float32)
    b2c = b2.reshape(Cout, 1).astype(jnp.float32)

    flops = 2 * N * H * W * 9 * (Cin * Cout + Cout * Cout)
    bytes_accessed = int(2 * N * Cin * H * W * 4          # input (incl. halo re-reads)
                         + N * Cout * H * W * 4           # output
                         + (w1m.size + w2m.size) * 2 + (b1c.size + b2c.size) * 4)

    out_flat = pl.pallas_call(
        make_resblock_kernel(TH, W, Cin, Cout, T),
        out_shape=jax.ShapeDtypeStruct((N, Cout, H * W), jnp.float32),
        grid_spec=pltpu.PrefetchScalarGridSpec(
            num_scalar_prefetch=0,
            grid=(N, T),
            in_specs=[
                # main TH-row strip
                pl.BlockSpec((1, Cin, TH, W), lambda n, t: (n, 0, t, 0)),
                # 8-row block ending just above the strip (top halo source)
                pl.BlockSpec((1, Cin, 8, W),
                             lambda n, t: (n, 0, jnp.maximum(t * m - 1, 0), 0)),
                # 8-row block starting just below the strip (bottom halo source)
                pl.BlockSpec((1, Cin, 8, W),
                             lambda n, t: (n, 0, jnp.minimum((t + 1) * m, HB - 1), 0)),
                pl.BlockSpec((Cout, 9 * Cin), lambda n, t: (0, 0)),
                pl.BlockSpec((Cout, 1), lambda n, t: (0, 0)),
                pl.BlockSpec((Cout, 9 * Cout), lambda n, t: (0, 0)),
                pl.BlockSpec((Cout, 1), lambda n, t: (0, 0)),
            ],
            out_specs=pl.BlockSpec((1, Cout, TH * W), lambda n, t: (n, 0, t)),
        ),
        compiler_params=pltpu.CompilerParams(
            dimension_semantics=("parallel", "parallel")),
        cost_estimate=pl.CostEstimate(
            flops=flops, transcendentals=0, bytes_accessed=bytes_accessed),
    )(x, x, x, w1m, b1c, w2m, b2c)

    # (N, Cout, H*W) -> (N, Cout, H, W): trailing-dim reshape, no data movement.
    return out_flat.reshape(N, Cout, H, W)


def reference_res_block_sr(x, w1, b1, w2, b2):
    """Pure-JAX reference (NCHW) with the same numerics as the kernel
    (bf16 matmul operands, f32 accumulation, f32 bias/activation/residual)."""
    dn = ("NCHW", "OIHW", "NCHW")
    h = jax.lax.conv_general_dilated(
        x.astype(jnp.bfloat16), w1.astype(jnp.bfloat16), (1, 1), "SAME",
        dimension_numbers=dn, preferred_element_type=jnp.float32)
    h = h + b1[None, :, None, None]
    h = jnp.where(h > 0, h, 0.2 * h)
    h = jax.lax.conv_general_dilated(
        h.astype(jnp.bfloat16), w2.astype(jnp.bfloat16), (1, 1), "SAME",
        dimension_numbers=dn, preferred_element_type=jnp.float32)
    h = h + b2[None, :, None, None]
    return x + h


if __name__ == "__main__":
    # Small, residual-compatible shapes: inchannel == outchannel.
    N, C, H, W = 2, 4, 16, 16
    Cout = C

    key = jax.random.PRNGKey(0)
    kx, kw1, kw2, kb1, kb2 = jax.random.split(key, 5)

    x = jax.random.normal(kx, (N, C, H, W), dtype=jnp.float32)

    # Conv weight init as in the PyTorch module: N(0, sqrt(2 / (kh*kw*out_ch))).
    std = math.sqrt(2.0 / (3 * 3 * Cout))
    w1 = std * jax.random.normal(kw1, (Cout, C, 3, 3), dtype=jnp.float32)
    w2 = std * jax.random.normal(kw2, (Cout, Cout, 3, 3), dtype=jnp.float32)
    # Small nonzero biases (module zeroes them at init; nonzero exercises the path).
    b1 = 0.1 * jax.random.normal(kb1, (Cout,), dtype=jnp.float32)
    b2 = 0.1 * jax.random.normal(kb2, (Cout,), dtype=jnp.float32)

    out = jax.block_until_ready(res_block_sr(x, w1, b1, w2, b2))
    ref = jax.block_until_ready(reference_res_block_sr(x, w1, b1, w2, b2))

    assert out.shape == (N, Cout, H, W)
    assert jnp.allclose(out, ref, atol=1e-3, rtol=1e-3), "mismatch vs JAX reference"

    print("KERNEL_OK")
</pallas_src>

<mosaic_0001>
module attributes {stable_mosaic.version = 11 : i64} {
  func.func @kernel(%arg0: i32, %arg1: i32, %arg2: memref<1x4x8x16xf32, #tpu.memory_space<vmem>>, %arg3: memref<1x4x8x16xf32, #tpu.memory_space<vmem>>, %arg4: memref<1x4x8x16xf32, #tpu.memory_space<vmem>>, %arg5: memref<4x36xbf16, #tpu.memory_space<vmem>>, %arg6: memref<4x1xf32, #tpu.memory_space<vmem>>, %arg7: memref<4x36xbf16, #tpu.memory_space<vmem>>, %arg8: memref<4x1xf32, #tpu.memory_space<vmem>>, %arg9: memref<1x4x128xf32, #tpu.memory_space<vmem>>) attributes {dimension_semantics = [#tpu.dimension_semantics<parallel>, #tpu.dimension_semantics<parallel>], iteration_bounds = array<i64: 2, 2>, scalar_prefetch = 0 : i64, scratch_operands = 0 : i64, tpu.core_type = #tpu.core_type<tc>, window_params = [{transform_indices = @transform_0, window_bounds = array<i64: 1, 4, 8, 16>}, {transform_indices = @transform_1, window_bounds = array<i64: 1, 4, 8, 16>}, {transform_indices = @transform_2, window_bounds = array<i64: 1, 4, 8, 16>}, {pipeline_mode = #tpu.pipeline_mode<synchronous>, transform_indices = @transform_3, window_bounds = array<i64: 4, 36>}, {pipeline_mode = #tpu.pipeline_mode<synchronous>, transform_indices = @transform_4, window_bounds = array<i64: 4, 1>}, {pipeline_mode = #tpu.pipeline_mode<synchronous>, transform_indices = @transform_5, window_bounds = array<i64: 4, 36>}, {pipeline_mode = #tpu.pipeline_mode<synchronous>, transform_indices = @transform_6, window_bounds = array<i64: 4, 1>}, {transform_indices = @transform_7, window_bounds = array<i64: 1, 4, 128>}]} {
    %c0 = arith.constant 0 : index
    %c0_0 = arith.constant 0 : index
    %c0_1 = arith.constant 0 : index
    %c0_2 = arith.constant 0 : index
    %0 = vector.load %arg2[%c0, %c0_0, %c0_1, %c0_2] : memref<1x4x8x16xf32, #tpu.memory_space<vmem>>, vector<1x4x8x16xf32>
    %1 = vector.shape_cast %0 : vector<1x4x8x16xf32> to vector<4x8x16xf32>
    %c0_i32 = arith.constant 0 : i32
    %2 = arith.cmpi sgt, %arg1, %c0_i32 : i32
    %c0_3 = arith.constant 0 : index
    %c0_4 = arith.constant 0 : index
    %c6 = arith.constant 6 : index
    %c0_5 = arith.constant 0 : index
    %3 = vector.load %arg3[%c0_3, %c0_4, %c6, %c0_5] : memref<1x4x8x16xf32, #tpu.memory_space<vmem>>, vector<1x4x2x16xf32>
    %4 = vector.shape_cast %3 : vector<1x4x2x16xf32> to vector<4x2x16xf32>
    %cst = arith.constant 0.000000e+00 : f32
    %5 = vector.broadcast %cst : f32 to vector<4x2x16xf32>
    %6 = arith.select %2, %4, %5 : vector<4x2x16xf32>
    %c1_i32 = arith.constant 1 : i32
    %7 = arith.cmpi slt, %arg1, %c1_i32 : i32
    %c0_6 = arith.constant 0 : index
    %c0_7 = arith.constant 0 : index
    %c0_8 = arith.constant 0 : index
    %c0_9 = arith.constant 0 : index
    %8 = vector.load %arg4[%c0_6, %c0_7, %c0_8, %c0_9] : memref<1x4x8x16xf32, #tpu.memory_space<vmem>>, vector<1x4x2x16xf32>
    %9 = vector.shape_cast %8 : vector<1x4x2x16xf32> to vector<4x2x16xf32>
    %cst_10 = arith.constant 0.000000e+00 : f32
    %10 = vector.broadcast %cst_10 : f32 to vector<4x2x16xf32>
    %11 = arith.select %7, %9, %10 : vector<4x2x16xf32>
    %12 = tpu.concatenate %6, %1, %11 in 1 : vector<4x2x16xf32>, vector<4x8x16xf32>, vector<4x2x16xf32> -> vector<4x12x16xf32>
    %cst_11 = arith.constant 0.000000e+00 : f32
    %13 = vector.broadcast %cst_11 : f32 to vector<4x12x1xf32>
    %14 = tpu.concatenate %13, %12, %13 in 2 : vector<4x12x1xf32>, vector<4x12x16xf32>, vector<4x12x1xf32> -> vector<4x12x18xf32>
    %15 = vector.extract_strided_slice %14 {offsets = [0, 0, 0], sizes = [4, 10, 16], strides = [1, 1, 1]} : vector<4x12x18xf32> to vector<4x10x16xf32>
    %16 = vector.shape_cast %15 : vector<4x10x16xf32> to vector<4x160xf32>
    %17 = vector.extract_strided_slice %14 {offsets = [0, 0, 1], sizes = [4, 10, 16], strides = [1, 1, 1]} : vector<4x12x18xf32> to vector<4x10x16xf32>
    %18 = vector.shape_cast %17 : vector<4x10x16xf32> to vector<4x160xf32>
    %19 = vector.extract_strided_slice %14 {offsets = [0, 0, 2], sizes = [4, 10, 16], strides = [1, 1, 1]} : vector<4x12x18xf32> to vector<4x10x16xf32>
    %20 = vector.shape_cast %19 : vector<4x10x16xf32> to vector<4x160xf32>
    %21 = vector.extract_strided_slice %14 {offsets = [0, 1, 0], sizes = [4, 10, 16], strides = [1, 1, 1]} : vector<4x12x18xf32> to vector<4x10x16xf32>
    %22 = vector.shape_cast %21 : vector<4x10x16xf32> to vector<4x160xf32>
    %23 = vector.extract_strided_slice %14 {offsets = [0, 1, 1], sizes = [4, 10, 16], strides = [1, 1, 1]} : vector<4x12x18xf32> to vector<4x10x16xf32>
    %24 = vector.shape_cast %23 : vector<4x10x16xf32> to vector<4x160xf32>
    %25 = vector.extract_strided_slice %14 {offsets = [0, 1, 2], sizes = [4, 10, 16], strides = [1, 1, 1]} : vector<4x12x18xf32> to vector<4x10x16xf32>
    %26 = vector.shape_cast %25 : vector<4x10x16xf32> to vector<4x160xf32>
    %27 = vector.extract_strided_slice %14 {offsets = [0, 2, 0], sizes = [4, 10, 16], strides = [1, 1, 1]} : vector<4x12x18xf32> to vector<4x10x16xf32>
    %28 = vector.shape_cast %27 : vector<4x10x16xf32> to vector<4x160xf32>
    %29 = vector.extract_strided_slice %14 {offsets = [0, 2, 1], sizes = [4, 10, 16], strides = [1, 1, 1]} : vector<4x12x18xf32> to vector<4x10x16xf32>
    %30 = vector.shape_cast %29 : vector<4x10x16xf32> to vector<4x160xf32>
    %31 = vector.extract_strided_slice %14 {offsets = [0, 2, 2], sizes = [4, 10, 16], strides = [1, 1, 1]} : vector<4x12x18xf32> to vector<4x10x16xf32>
    %32 = vector.shape_cast %31 : vector<4x10x16xf32> to vector<4x160xf32>
    %33 = tpu.concatenate %16, %18, %20, %22, %24, %26, %28, %30, %32 in 0 : vector<4x160xf32>, vector<4x160xf32>, vector<4x160xf32>, vector<4x160xf32>, vector<4x160xf32>, vector<4x160xf32>, vector<4x160xf32>, vector<4x160xf32>, vector<4x160xf32> -> vector<36x160xf32>
    %c0_12 = arith.constant 0 : index
    %c0_13 = arith.constant 0 : index
    %34 = vector.load %arg5[%c0_12, %c0_13] : memref<4x36xbf16, #tpu.memory_space<vmem>>, vector<4x36xbf16>
    %35 = arith.truncf %33 : vector<36x160xf32> to vector<36x160xbf16>
    %cst_14 = arith.constant dense<0.000000e+00> : vector<4x160xf32>
    %36 = tpu.matmul %34, %35, %cst_14 {dimension_numbers = #tpu.dot_dimension_numbers<[1], [0], [0], [1], [0, 0, 1, 1], [], []>} : vector<4x36xbf16>, vector<36x160xbf16>, vector<4x160xf32> -> vector<4x160xf32>
    %c0_15 = arith.constant 0 : index
    %c0_16 = arith.constant 0 : index
    %37 = vector.load %arg6[%c0_15, %c0_16] : memref<4x1xf32, #tpu.memory_space<vmem>>, vector<4x1xf32>
    %38 = vector.broadcast %37 : vector<4x1xf32> to vector<4x160xf32>
    %39 = arith.addf %36, %38 : vector<4x160xf32>
    %cst_17 = arith.constant 0.000000e+00 : f32
    %40 = vector.broadcast %cst_17 : f32 to vector<4x160xf32>
    %41 = arith.cmpf ogt, %39, %40 : vector<4x160xf32>
    %cst_18 = arith.constant 2.000000e-01 : f32
    %42 = vector.broadcast %cst_18 : f32 to vector<4x160xf32>
    %43 = arith.mulf %42, %39 : vector<4x160xf32>
    %44 = arith.select %41, %39, %43 : vector<4x160xi1>, vector<4x160xf32>
    %45 = vector.shape_cast %44 : vector<4x160xf32> to vector<4x10x16xf32>
    %46 = tpu.iota {dimensions = array<i32: 1>} : vector<4x10x16xi32>
    %c0_i32_19 = arith.constant 0 : i32
    %47 = vector.broadcast %c0_i32_19 : i32 to vector<4x10x16xi32>
    %48 = arith.cmpi eq, %46, %47 : vector<4x10x16xi32>
    %c0_i32_20 = arith.constant 0 : i32
    %49 = arith.cmpi eq, %arg1, %c0_i32_20 : i32
    %50 = vector.broadcast %49 : i1 to vector<4x10x16xi1>
    %51 = arith.andi %48, %50 : vector<4x10x16xi1>
    %cst_21 = arith.constant 0.000000e+00 : f32
    %52 = vector.broadcast %cst_21 : f32 to vector<4x10x16xf32>
    %53 = arith.select %51, %52, %45 : vector<4x10x16xi1>, vector<4x10x16xf32>
    %c9_i32 = arith.constant 9 : i32
    %54 = vector.broadcast %c9_i32 : i32 to vector<4x10x16xi32>
    %55 = arith.cmpi eq, %46, %54 : vector<4x10x16xi32>
    %c1_i32_22 = arith.constant 1 : i32
    %56 = arith.cmpi eq, %arg1, %c1_i32_22 : i32
    %57 = vector.broadcast %56 : i1 to vector<4x10x16xi1>
    %58 = arith.andi %55, %57 : vector<4x10x16xi1>
    %cst_23 = arith.constant 0.000000e+00 : f32
    %59 = vector.broadcast %cst_23 : f32 to vector<4x10x16xf32>
    %60 = arith.select %58, %59, %53 : vector<4x10x16xi1>, vector<4x10x16xf32>
    %cst_24 = arith.constant 0.000000e+00 : f32
    %61 = vector.broadcast %cst_24 : f32 to vector<4x10x1xf32>
    %62 = tpu.concatenate %61, %60, %61 in 2 : vector<4x10x1xf32>, vector<4x10x16xf32>, vector<4x10x1xf32> -> vector<4x10x18xf32>
    %63 = vector.extract_strided_slice %62 {offsets = [0, 0, 0], sizes = [4, 8, 16], strides = [1, 1, 1]} : vector<4x10x18xf32> to vector<4x8x16xf32>
    %64 = vector.shape_cast %63 : vector<4x8x16xf32> to vector<4x128xf32>
    %65 = vector.extract_strided_slice %62 {offsets = [0, 0, 1], sizes = [4, 8, 16], strides = [1, 1, 1]} : vector<4x10x18xf32> to vector<4x8x16xf32>
    %66 = vector.shape_cast %65 : vector<4x8x16xf32> to vector<4x128xf32>
    %67 = vector.extract_strided_slice %62 {offsets = [0, 0, 2], sizes = [4, 8, 16], strides = [1, 1, 1]} : vector<4x10x18xf32> to vector<4x8x16xf32>
    %68 = vector.shape_cast %67 : vector<4x8x16xf32> to vector<4x128xf32>
    %69 = vector.extract_strided_slice %62 {offsets = [0, 1, 0], sizes = [4, 8, 16], strides = [1, 1, 1]} : vector<4x10x18xf32> to vector<4x8x16xf32>
    %70 = vector.shape_cast %69 : vector<4x8x16xf32> to vector<4x128xf32>
    %71 = vector.extract_strided_slice %62 {offsets = [0, 1, 1], sizes = [4, 8, 16], strides = [1, 1, 1]} : vector<4x10x18xf32> to vector<4x8x16xf32>
    %72 = vector.shape_cast %71 : vector<4x8x16xf32> to vector<4x128xf32>
    %73 = vector.extract_strided_slice %62 {offsets = [0, 1, 2], sizes = [4, 8, 16], strides = [1, 1, 1]} : vector<4x10x18xf32> to vector<4x8x16xf32>
    %74 = vector.shape_cast %73 : vector<4x8x16xf32> to vector<4x128xf32>
    %75 = vector.extract_strided_slice %62 {offsets = [0, 2, 0], sizes = [4, 8, 16], strides = [1, 1, 1]} : vector<4x10x18xf32> to vector<4x8x16xf32>
    %76 = vector.shape_cast %75 : vector<4x8x16xf32> to vector<4x128xf32>
    %77 = vector.extract_strided_slice %62 {offsets = [0, 2, 1], sizes = [4, 8, 16], strides = [1, 1, 1]} : vector<4x10x18xf32> to vector<4x8x16xf32>
    %78 = vector.shape_cast %77 : vector<4x8x16xf32> to vector<4x128xf32>
    %79 = vector.extract_strided_slice %62 {offsets = [0, 2, 2], sizes = [4, 8, 16], strides = [1, 1, 1]} : vector<4x10x18xf32> to vector<4x8x16xf32>
    %80 = vector.shape_cast %79 : vector<4x8x16xf32> to vector<4x128xf32>
    %81 = tpu.concatenate %64, %66, %68, %70, %72, %74, %76, %78, %80 in 0 : vector<4x128xf32>, vector<4x128xf32>, vector<4x128xf32>, vector<4x128xf32>, vector<4x128xf32>, vector<4x128xf32>, vector<4x128xf32>, vector<4x128xf32>, vector<4x128xf32> -> vector<36x128xf32>
    %c0_25 = arith.constant 0 : index
    %c0_26 = arith.constant 0 : index
    %82 = vector.load %arg7[%c0_25, %c0_26] : memref<4x36xbf16, #tpu.memory_space<vmem>>, vector<4x36xbf16>
    %83 = arith.truncf %81 : vector<36x128xf32> to vector<36x128xbf16>
    %cst_27 = arith.constant dense<0.000000e+00> : vector<4x128xf32>
    %84 = tpu.matmul %82, %83, %cst_27 {dimension_numbers = #tpu.dot_dimension_numbers<[1], [0], [0], [1], [0, 0, 1, 1], [], []>} : vector<4x36xbf16>, vector<36x128xbf16>, vector<4x128xf32> -> vector<4x128xf32>
    %c0_28 = arith.constant 0 : index
    %c0_29 = arith.constant 0 : index
    %85 = vector.load %arg8[%c0_28, %c0_29] : memref<4x1xf32, #tpu.memory_space<vmem>>, vector<4x1xf32>
    %86 = vector.broadcast %85 : vector<4x1xf32> to vector<4x128xf32>
    %87 = arith.addf %84, %86 : vector<4x128xf32>
    %88 = vector.shape_cast %1 : vector<4x8x16xf32> to vector<4x128xf32>
    %89 = arith.addf %87, %88 : vector<4x128xf32>
    %c0_30 = arith.constant 0 : index
    %c0_31 = arith.constant 0 : index
    %c0_32 = arith.constant 0 : index
    %90 = vector.load %arg9[%c0_30, %c0_31, %c0_32] : memref<1x4x128xf32, #tpu.memory_space<vmem>>, vector<1x4x128xf32>
    %91 = vector.shape_cast %90 : vector<1x4x128xf32> to vector<4x128xf32>
    %92 = vector.shape_cast %89 : vector<4x128xf32> to vector<1x4x128xf32>
    tpu.vector_store %arg9[%c0_30, %c0_31, %c0_32], %92 {strides = array<i32>} : memref<1x4x128xf32, #tpu.memory_space<vmem>>, vector<1x4x128xf32>,
    return
  }
  func.func @transform_0(%arg0: i32, %arg1: i32) -> (i32, i32, i32, i32) {
    %c0_i32 = arith.constant 0 : i32
    %c0_i32_0 = arith.constant 0 : i32
    %c0_i32_1 = arith.constant 0 : i32
    return %arg0, %c0_i32, %arg1, %c0_i32_0 : i32, i32, i32, i32
  }
  func.func @transform_1(%arg0: i32, %arg1: i32) -> (i32, i32, i32, i32) {
    %c1_i32 = arith.constant 1 : i32
    %0 = arith.muli %arg1, %c1_i32 : i32
    %c1_i32_0 = arith.constant 1 : i32
    %1 = arith.subi %0, %c1_i32_0 : i32
    %c0_i32 = arith.constant 0 : i32
    %2 = arith.maxsi %1, %c0_i32 : i32
    %c0_i32_1 = arith.constant 0 : i32
    %c0_i32_2 = arith.constant 0 : i32
    %c0_i32_3 = arith.constant 0 : i32
    return %arg0, %c0_i32_1, %2, %c0_i32_2 : i32, i32, i32, i32
  }
  func.func @transform_2(%arg0: i32, %arg1: i32) -> (i32, i32, i32, i32) {
    %c1_i32 = arith.constant 1 : i32
    %0 = arith.addi %arg1, %c1_i32 : i32
    %c1_i32_0 = arith.constant 1 : i32
    %1 = arith.muli %0, %c1_i32_0 : i32
    %c1_i32_1 = arith.constant 1 : i32
    %2 = arith.minsi %1, %c1_i32_1 : i32
    %c0_i32 = arith.constant 0 : i32
    %c0_i32_2 = arith.constant 0 : i32
    %c0_i32_3 = arith.constant 0 : i32
    return %arg0, %c0_i32, %2, %c0_i32_2 : i32, i32, i32, i32
  }
  func.func @transform_3(%arg0: i32, %arg1: i32) -> (i32, i32) {
    %c0_i32 = arith.constant 0 : i32
    %c0_i32_0 = arith.constant 0 : i32
    %c0_i32_1 = arith.constant 0 : i32
    return %c0_i32, %c0_i32_0 : i32, i32
  }
  func.func @transform_4(%arg0: i32, %arg1: i32) -> (i32, i32) {
    %c0_i32 = arith.constant 0 : i32
    %c0_i32_0 = arith.constant 0 : i32
    %c0_i32_1 = arith.constant 0 : i32
    return %c0_i32, %c0_i32_0 : i32, i32
  }
  func.func @transform_5(%arg0: i32, %arg1: i32) -> (i32, i32) {
    %c0_i32 = arith.constant 0 : i32
    %c0_i32_0 = arith.constant 0 : i32
    %c0_i32_1 = arith.constant 0 : i32
    return %c0_i32, %c0_i32_0 : i32, i32
  }
  func.func @transform_6(%arg0: i32, %arg1: i32) -> (i32, i32) {
    %c0_i32 = arith.constant 0 : i32
    %c0_i32_0 = arith.constant 0 : i32
    %c0_i32_1 = arith.constant 0 : i32
    return %c0_i32, %c0_i32_0 : i32, i32
  }
  func.func @transform_7(%arg0: i32, %arg1: i32) -> (i32, i32, i32) {
    %c0_i32 = arith.constant 0 : i32
    %c0_i32_0 = arith.constant 0 : i32
    return %arg0, %c0_i32, %arg1 : i32, i32, i32
  }
}

</mosaic_0001>

<llo_original>
// kernel: tpu_custom_call.1
$region0: #{tpu_custom_call.1}
  #allocation0 [shape = 'u32[]', space=smem, size = 0x4, offset = 0x4, fixed_abs, tag = 'smem constant byte address 0x4 - core index']
  #allocation1 [shape = 'u32[144,128]{1,0:T(1,128)}', space=vmem, size = 0x12000, scoped, tag = 'internal scratch']
  %s0 = inlined_call_operand.hbm [shape: f32[2,4,16,16], index: 0, kind: input, shape index: {}]
  %s1 = inlined_call_operand.hbm [shape: f32[2,4,16,16], index: 1, kind: input, shape index: {}]
  %s2 = inlined_call_operand.hbm [shape: f32[2,4,16,16], index: 2, kind: input, shape index: {}]
  %s3 = inlined_call_operand.vmem [shape: bf16[4,36], index: 3, kind: input, shape index: {}]
  %s4 = inlined_call_operand.vmem [shape: f32[4,1], index: 4, kind: input, shape index: {}]
  %s5 = inlined_call_operand.vmem [shape: bf16[4,36], index: 5, kind: input, shape index: {}]
  %s6 = inlined_call_operand.vmem [shape: f32[4,1], index: 6, kind: input, shape index: {}]
  %s7 = inlined_call_operand.hbm [shape: f32[2,4,256], index: 7, kind: output, shape index: {}]
  %s8 = sld [smem:[#allocation0]]
  $region73: #{tpu_custom_call.1} parent=0
    _
  %s10 = ssub.s32 1, %s8
  %s11 = scalar_select 0, %s10, %s8
  $region1: #{tpu_custom_call.1} parent=0
    #allocation2 [shape = 'u8[32768]{0}', space=vmem, size = 0x8000, scoped, tag = 'input window, operand 0']
    #allocation3 [shape = 's32[2]{0}', space=sflag, size = 0x8, scoped, tag = 'scoped memory for tpu_custom_call.1']
    #allocation4 [shape = 's32[2]{0}', space=sflag, size = 0x8, scoped, tag = 'scoped memory for tpu_custom_call.1']
    #allocation5 [shape = 'u8[32768]{0}', space=vmem, size = 0x8000, scoped, tag = 'input window, operand 1']
    #allocation6 [shape = 's32[2]{0}', space=sflag, size = 0x8, scoped, tag = 'scoped memory for tpu_custom_call.1']
    #allocation7 [shape = 'u8[32768]{0}', space=vmem, size = 0x8000, scoped, tag = 'input window, operand 2']
    #allocation8 [shape = 'u8[4096]{0}', space=vmem, size = 0x1000, scoped, tag = 'output window, operand 0']
    %12 = vsyncpa [#allocation3], 0
    %s13 = scalar_lea.sflag [#allocation3], 1
    %14 = vsyncpa %s13, 0
    %15 = vsyncpa [#allocation6], 0
    %s16 = scalar_lea.sflag [#allocation6], 1
    %17 = vsyncpa %s16, 0
    %18 = vsyncpa [#allocation4], 0
    %s19 = scalar_lea.sflag [#allocation4], 1
    %20 = vsyncpa %s19, 0
    loop: start=0, step=1, limit=6
    $region2: #{tpu_custom_call.1} parent=1 // loop_pre_header
      _
    $region3: #{tpu_custom_call.1} parent=1 // loop_header
      %s22 = sphi 0, %s26
      %p23 = scmp.ge.s32.totalorder %s22, 6
      %s29 = sphi 0, %s41
      %s30 = sphi 0, %s37
      %s31 = sphi 0, %s29
      %s32 = sphi 0, %s30
      %s33 = sphi 0, %s31
      %s34 = sphi 0, %s32
      %s46 = sphi 0, %s48
      %s49 = sphi 0, %s46
      %s50 = sphi 0, %s49
      %s66 = sphi 0, %s50
      %s80 = sphi 0, %s82
      %s83 = sphi 0, %s80
      %s84 = sphi 0, %s83
      %s100 = sphi 0, %s84
      %s114 = sphi 0, %s116
      %s117 = sphi 0, %s114
      %s118 = sphi 0, %s117
      %s134 = sphi 0, %s118
      %s138 = sphi 0, %s138
      %s140 = sphi 0, %s138
      %s141 = sphi 0, %s140
      %s155 = sphi 0, %s141
      %s159 = sphi 0, %s159
      %s161 = sphi 0, %s159
      %s162 = sphi 0, %s161
      %s176 = sphi 0, %s162
      %s180 = sphi 0, %s180
      %s182 = sphi 0, %s180
      %s183 = sphi 0, %s182
      %s197 = sphi 0, %s183
      %s201 = sphi 0, %s201
      %s203 = sphi 0, %s201
      %s204 = sphi 0, %s203
      %s218 = sphi 0, %s204
      %s226 = sphi 0, %s228
      %s229 = sphi 0, %s226
      %s230 = sphi 0, %s229
      %s246 = sphi 0, %s230
    $region4: #{tpu_custom_call.1} parent=1 // loop_header_branch
      %25 = sbr.rel (%p23) target = $region8
    $region5: #{tpu_custom_call.1} parent=1 // loop_body
      %s27 = ssub.s32 %s22, 1
      %s28 = ssub.s32 %s22, 2
      %s35 = sadd.s32 1, %s30
      %p36 = scmp.ge.s32.totalorder %s35, 2
      %s37 = scalar_select %p36, 0, %s35
      %s38 = sadd.s32 1, %s29
      %s39 = scalar_select %p36, %s38, %s29
      %p40 = scmp.ge.s32.totalorder %s39, 2
      %s41 = scalar_select %p40, 0, %s39
      %s42 = ssub.s32 %s29, %s41
      %s43 = ssub.s32 %s30, %s37
      %s44 = sor.u32 %s42, %s43
      %p45 = scmp.eq.s32.totalorder %s44, 0
      %s47 = sadd.s32 %s46, 1
      %s48 = scalar_select %p45, %s46, %s47
      %p51 = pneg %p45
      %p52 = scmp.eq.s32.totalorder %s22, 3
      %p53 = por %p51, %p52
      %p54 = scmp.ne.s32.totalorder %s46, %s49
      %p55 = scmp.eq.s32.totalorder %s22, 0
      %p56 = por %p54, %p55
      %p57 = scmp.ne.s32.totalorder %s46, %s49
      %p58 = scmp.eq.s32.totalorder %s27, 3
      %p59 = por %p57, %p58
      %p60 = scmp.ne.s32.totalorder %s49, %s50
      %p61 = scmp.eq.s32.totalorder %s27, 0
      %p62 = por %p60, %p61
      %p63 = scmp.ne.s32.totalorder %s49, %s50
      %p64 = scmp.eq.s32.totalorder %s28, 3
      %p65 = por %p63, %p64
      %p67 = scmp.ne.s32.totalorder %s50, %s66
      %p68 = scmp.eq.s32.totalorder %s28, 0
      %p69 = por %p67, %p68
      %s70 = ssub.s32 %s30, 1
      %p71 = scmp.gt.s32.totalorder %s70, 0
      %s72 = scalar_select %p71, %s70, 0
      %s73 = ssub.s32 %s37, 1
      %p74 = scmp.gt.s32.totalorder %s73, 0
      %s75 = scalar_select %p74, %s73, 0
      %s76 = ssub.s32 %s29, %s41
      %s77 = ssub.s32 %s72, %s75
      %s78 = sor.u32 %s76, %s77
      %p79 = scmp.eq.s32.totalorder %s78, 0
      %s81 = sadd.s32 %s80, 1
      %s82 = scalar_select %p79, %s80, %s81
      %p85 = pneg %p79
      %p86 = scmp.eq.s32.totalorder %s22, 3
      %p87 = por %p85, %p86
      %p88 = scmp.ne.s32.totalorder %s80, %s83
      %p89 = scmp.eq.s32.totalorder %s22, 0
      %p90 = por %p88, %p89
      %p91 = scmp.ne.s32.totalorder %s80, %s83
      %p92 = scmp.eq.s32.totalorder %s27, 3
      %p93 = por %p91, %p92
      %p94 = scmp.ne.s32.totalorder %s83, %s84
      %p95 = scmp.eq.s32.totalorder %s27, 0
      %p96 = por %p94, %p95
      %p97 = scmp.ne.s32.totalorder %s83, %s84
      %p98 = scmp.eq.s32.totalorder %s28, 3
      %p99 = por %p97, %p98
      %p101 = scmp.ne.s32.totalorder %s84, %s100
      %p102 = scmp.eq.s32.totalorder %s28, 0
      %p103 = por %p101, %p102
      %s104 = sadd.s32 %s30, 1
      %p105 = scmp.lt.s32.totalorder %s104, 1
      %s106 = scalar_select %p105, %s104, 1
      %s107 = sadd.s32 %s37, 1
      %p108 = scmp.lt.s32.totalorder %s107, 1
      %s109 = scalar_select %p108, %s107, 1
      %s110 = ssub.s32 %s29, %s41
      %s111 = ssub.s32 %s106, %s109
      %s112 = sor.u32 %s110, %s111
      %p113 = scmp.eq.s32.totalorder %s112, 0
      %s115 = sadd.s32 %s114, 1
      %s116 = scalar_select %p113, %s114, %s115
      %p119 = pneg %p113
      %p120 = scmp.eq.s32.totalorder %s22, 3
      %p121 = por %p119, %p120
      %p122 = scmp.ne.s32.totalorder %s114, %s117
      %p123 = scmp.eq.s32.totalorder %s22, 0
      %p124 = por %p122, %p123
      %p125 = scmp.ne.s32.totalorder %s114, %s117
      %p126 = scmp.eq.s32.totalorder %s27, 3
      %p127 = por %p125, %p126
      %p128 = scmp.ne.s32.totalorder %s117, %s118
      %p129 = scmp.eq.s32.totalorder %s27, 0
      %p130 = por %p128, %p129
      %p131 = scmp.ne.s32.totalorder %s117, %s118
      %p132 = scmp.eq.s32.totalorder %s28, 3
      %p133 = por %p131, %p132
      %p135 = scmp.ne.s32.totalorder %s118, %s134
      %p136 = scmp.eq.s32.totalorder %s28, 0
      %p137 = por %p135, %p136
      %s139 = sadd.s32 %s138, 1
      %p142 = scmp.eq.s32.totalorder %s22, 3
      %p143 = scmp.ne.s32.totalorder %s138, %s140
      %p144 = scmp.eq.s32.totalorder %s22, 0
      %p145 = por %p143, %p144
      %p146 = scmp.ne.s32.totalorder %s138, %s140
      %p147 = scmp.eq.s32.totalorder %s27, 3
      %p148 = por %p146, %p147
      %p149 = scmp.ne.s32.totalorder %s140, %s141
      %p150 = scmp.eq.s32.totalorder %s27, 0
      %p151 = por %p149, %p150
      %p152 = scmp.ne.s32.totalorder %s140, %s141
      %p153 = scmp.eq.s32.totalorder %s28, 3
      %p154 = por %p152, %p153
      %p156 = scmp.ne.s32.totalorder %s141, %s155
      %p157 = scmp.eq.s32.totalorder %s28, 0
      %p158 = por %p156, %p157
      %s160 = sadd.s32 %s159, 1
      %p163 = scmp.eq.s32.totalorder %s22, 3
      %p164 = scmp.ne.s32.totalorder %s159, %s161
      %p165 = scmp.eq.s32.totalorder %s22, 0
      %p166 = por %p164, %p165
      %p167 = scmp.ne.s32.totalorder %s159, %s161
      %p168 = scmp.eq.s32.totalorder %s27, 3
      %p169 = por %p167, %p168
      %p170 = scmp.ne.s32.totalorder %s161, %s162
      %p171 = scmp.eq.s32.totalorder %s27, 0
      %p172 = por %p170, %p171
      %p173 = scmp.ne.s32.totalorder %s161, %s162
      %p174 = scmp.eq.s32.totalorder %s28, 3
      %p175 = por %p173, %p174
      %p177 = scmp.ne.s32.totalorder %s162, %s176
      %p178 = scmp.eq.s32.totalorder %s28, 0
      %p179 = por %p177, %p178
      %s181 = sadd.s32 %s180, 1
      %p184 = scmp.eq.s32.totalorder %s22, 3
      %p185 = scmp.ne.s32.totalorder %s180, %s182
      %p186 = scmp.eq.s32.totalorder %s22, 0
      %p187 = por %p185, %p186
      %p188 = scmp.ne.s32.totalorder %s180, %s182
      %p189 = scmp.eq.s32.totalorder %s27, 3
      %p190 = por %p188, %p189
      %p191 = scmp.ne.s32.totalorder %s182, %s183
      %p192 = scmp.eq.s32.totalorder %s27, 0
      %p193 = por %p191, %p192
      %p194 = scmp.ne.s32.totalorder %s182, %s183
      %p195 = scmp.eq.s32.totalorder %s28, 3
      %p196 = por %p194, %p195
      %p198 = scmp.ne.s32.totalorder %s183, %s197
      %p199 = scmp.eq.s32.totalorder %s28, 0
      %p200 = por %p198, %p199
      %s202 = sadd.s32 %s201, 1
      %p205 = scmp.eq.s32.totalorder %s22, 3
      %p206 = scmp.ne.s32.totalorder %s201, %s203
      %p207 = scmp.eq.s32.totalorder %s22, 0
      %p208 = por %p206, %p207
      %p209 = scmp.ne.s32.totalorder %s201, %s203
      %p210 = scmp.eq.s32.totalorder %s27, 3
      %p211 = por %p209, %p210
      %p212 = scmp.ne.s32.totalorder %s203, %s204
      %p213 = scmp.eq.s32.totalorder %s27, 0
      %p214 = por %p212, %p213
      %p215 = scmp.ne.s32.totalorder %s203, %s204
      %p216 = scmp.eq.s32.totalorder %s28, 3
      %p217 = por %p215, %p216
      %p219 = scmp.ne.s32.totalorder %s204, %s218
      %p220 = scmp.eq.s32.totalorder %s28, 0
      %p221 = por %p219, %p220
      %s222 = ssub.s32 %s29, %s41
      %s223 = ssub.s32 %s30, %s37
      %s224 = sor.u32 %s222, %s223
      %p225 = scmp.eq.s32.totalorder %s224, 0
      %s227 = sadd.s32 %s226, 1
      %s228 = scalar_select %p225, %s226, %s227
      %p231 = pneg %p225
      %p232 = scmp.eq.s32.totalorder %s22, 3
      %p233 = por %p231, %p232
      %p234 = scmp.ne.s32.totalorder %s226, %s229
      %p235 = scmp.eq.s32.totalorder %s22, 0
      %p236 = por %p234, %p235
      %p237 = scmp.ne.s32.totalorder %s226, %s229
      %p238 = scmp.eq.s32.totalorder %s27, 3
      %p239 = por %p237, %p238
      %p240 = scmp.ne.s32.totalorder %s229, %s230
      %p241 = scmp.eq.s32.totalorder %s27, 0
      %p242 = por %p240, %p241
      %p243 = scmp.ne.s32.totalorder %s229, %s230
      %p244 = scmp.eq.s32.totalorder %s28, 3
      %p245 = por %p243, %p244
      %p247 = scmp.ne.s32.totalorder %s230, %s246
      %p248 = scmp.eq.s32.totalorder %s28, 0
      %p249 = por %p247, %p248
      %p250 = scmp.le.s32.totalorder 1, %s22
      %p251 = scmp.lt.s32.totalorder %s22, 5
      %p252 = pnand %p250, %p251
      %p253 = pneg %p252
      // Predicated region
      $region9: #{tpu_custom_call.1} parent=5 // pred_check
        _
      $region10: #{tpu_custom_call.1} parent=5 // pred_check_branch
        %255 = sbr.rel (%p252) target = $region12
      $region11: #{tpu_custom_call.1} parent=5 // pred_region
        %s256 = ssub.s32 %s22, 1
        // Predicated region
        $region13: #{tpu_custom_call.1} parent=11 // pred_check
          %p257 = pneg %p151
        $region14: #{tpu_custom_call.1} parent=11 // pred_check_branch
          %259 = sbr.rel (%p257) target = $region16
        $region15: #{tpu_custom_call.1} parent=11 // pred_region
          _
        $region16: #{tpu_custom_call.1} parent=11 // pred_fallthru
          _
        // Predicated region
        $region17: #{tpu_custom_call.1} parent=11 // pred_check
          %p260 = pneg %p172
        $region18: #{tpu_custom_call.1} parent=11 // pred_check_branch
          %262 = sbr.rel (%p260) target = $region20
        $region19: #{tpu_custom_call.1} parent=11 // pred_region
          _
        $region20: #{tpu_custom_call.1} parent=11 // pred_fallthru
          _
        // Predicated region
        $region21: #{tpu_custom_call.1} parent=11 // pred_check
          %p263 = pneg %p193
        $region22: #{tpu_custom_call.1} parent=11 // pred_check_branch
          %265 = sbr.rel (%p263) target = $region24
        $region23: #{tpu_custom_call.1} parent=11 // pred_region
          _
        $region24: #{tpu_custom_call.1} parent=11 // pred_fallthru
          _
        // Predicated region
        $region25: #{tpu_custom_call.1} parent=11 // pred_check
          %p266 = pneg %p214
        $region26: #{tpu_custom_call.1} parent=11 // pred_check_branch
          %268 = sbr.rel (%p266) target = $region28
        $region27: #{tpu_custom_call.1} parent=11 // pred_region
          _
        $region28: #{tpu_custom_call.1} parent=11 // pred_fallthru
          _
      $region12: #{tpu_custom_call.1} parent=5 // pred_fallthru
        _
      %p269 = scmp.lt.s32.totalorder %s22, 4
      // Predicated region
      $region29: #{tpu_custom_call.1} parent=5 // pred_check
        %p270 = pneg %p269
      $region30: #{tpu_custom_call.1} parent=5 // pred_check_branch
        %272 = sbr.rel (%p270) target = $region32
      $region31: #{tpu_custom_call.1} parent=5 // pred_region
        // Predicated region
        $region33: #{tpu_custom_call.1} parent=31 // pred_check
          %p273 = pneg %p56
        $region34: #{tpu_custom_call.1} parent=31 // pred_check_branch
          %275 = sbr.rel (%p273) target = $region36
        $region35: #{tpu_custom_call.1} parent=31 // pred_region
          %s276 = sand.u32 %s46, 1
          %s277 = scalar_lea.sflag [#allocation3], %s276
          %s278 = sand.u32 %s46, 1
          %s279 = smul.addr %s278, 32
          %s280 = scalar_lea.vmem [#allocation2], %s279
          %s282 = ssub.s32 512, 512
          %283 = vsyncadd %s277, %s282
          %s284 = smul.addr %s29, 8
          %s285 = sadd.s32 %s30, %s284
          %s286 = smul.addr %s285, 128
          %s287 = scalar_lea.hbm %s0, %s286
          %s288 = sshll.u32 %s280, 4
          %s289 = int_to_ptr.vmem [resolvable:$true] %s288
          %294 = dma.hbm_to_vmem [thread:$0]  %s287, 512, %s289, %s277, 256, 128, 8
        $region36: #{tpu_custom_call.1} parent=31 // pred_fallthru
          _
        // Predicated region
        $region37: #{tpu_custom_call.1} parent=31 // pred_check
          %p295 = pneg %p90
        $region38: #{tpu_custom_call.1} parent=31 // pred_check_branch
          %297 = sbr.rel (%p295) target = $region40
        $region39: #{tpu_custom_call.1} parent=31 // pred_region
          %s298 = sand.u32 %s22, 1
          %s299 = scalar_lea.sflag [#allocation6], %s298
          %s300 = sand.u32 %s80, 1
          %s301 = smul.addr %s300, 32
          %s302 = scalar_lea.vmem [#allocation5], %s301
          %s303 = ssub.s32 %s30, 1
          %p304 = scmp.gt.s32.totalorder %s303, 0
          %s305 = scalar_select %p304, %s303, 0
          %s307 = ssub.s32 512, 512
          %308 = vsyncadd %s299, %s307
          %s309 = smul.addr %s29, 8
          %s310 = sadd.s32 %s305, %s309
          %s311 = smul.addr %s310, 128
          %s312 = scalar_lea.hbm %s1, %s311
          %s313 = sshll.u32 %s302, 4
          %s314 = int_to_ptr.vmem [resolvable:$true] %s313
          %319 = dma.hbm_to_vmem [thread:$0]  %s312, 512, %s314, %s299, 256, 128, 8
        $region40: #{tpu_custom_call.1} parent=31 // pred_fallthru
          _
        // Predicated region
        $region41: #{tpu_custom_call.1} parent=31 // pred_check
          %p320 = pneg %p124
        $region42: #{tpu_custom_call.1} parent=31 // pred_check_branch
          %322 = sbr.rel (%p320) target = $region44
        $region43: #{tpu_custom_call.1} parent=31 // pred_region
          %s323 = sand.u32 %s22, 1
          %s324 = scalar_lea.sflag [#allocation6], %s323
          %s325 = sand.u32 %s114, 1
          %s326 = smul.addr %s325, 32
          %s327 = scalar_lea.vmem [#allocation7], %s326
          %s328 = sadd.s32 %s30, 1
          %p329 = scmp.lt.s32.totalorder %s328, 1
          %s330 = scalar_select %p329, %s328, 1
          %s332 = ssub.s32 512, 512
          %333 = vsyncadd %s324, %s332
          %s334 = smul.addr %s29, 8
          %s335 = sadd.s32 %s330, %s334
          %s336 = smul.addr %s335, 128
          %s337 = scalar_lea.hbm %s2, %s336
          %s338 = sshll.u32 %s327, 4
          %s339 = int_to_ptr.vmem [resolvable:$true] %s338
          %344 = dma.hbm_to_vmem [thread:$0]  %s337, 512, %s339, %s324, 256, 128, 8
        $region44: #{tpu_custom_call.1} parent=31 // pred_fallthru
          _
      $region32: #{tpu_custom_call.1} parent=5 // pred_fallthru
        _
      %p345 = scmp.le.s32.totalorder 1, %s22
      %p346 = scmp.lt.s32.totalorder %s22, 5
      %p347 = pnand %p345, %p346
      %p348 = pneg %p347
      // Predicated region
      $region45: #{tpu_custom_call.1} parent=5 // pred_check
        _
      $region46: #{tpu_custom_call.1} parent=5 // pred_check_branch
        %350 = sbr.rel (%p347) target = $region48
      $region47: #{tpu_custom_call.1} parent=5 // pred_region
        %s351 = ssub.s32 %s22, 1
        %s352 = sand.u32 %s49, 1
        %s353 = scalar_lea.sflag [#allocation3], %s352
        %s354 = sand.u32 %s49, 1
        %s355 = smul.addr %s354, 32
        %s356 = scalar_lea.vmem [#allocation2], %s355
        // Predicated region
        $region49: #{tpu_custom_call.1} parent=47 // pred_check
          %p357 = pneg %p62
        $region50: #{tpu_custom_call.1} parent=47 // pred_check_branch
          %359 = sbr.rel (%p357) target = $region52
        $region51: #{tpu_custom_call.1} parent=47 // pred_region
          %360 = dma.done %s353, 512
        $region52: #{tpu_custom_call.1} parent=47 // pred_fallthru
          _
        %s361 = sand.u32 %s27, 1
        %s362 = scalar_lea.sflag [#allocation6], %s361
        %s363 = sand.u32 %s83, 1
        %s364 = smul.addr %s363, 32
        %s365 = scalar_lea.vmem [#allocation5], %s364
        // Predicated region
        $region53: #{tpu_custom_call.1} parent=47 // pred_check
          %p366 = pneg %p96
        $region54: #{tpu_custom_call.1} parent=47 // pred_check_branch
          %368 = sbr.rel (%p366) target = $region56
        $region55: #{tpu_custom_call.1} parent=47 // pred_region
          %369 = dma.done %s362, 512
        $region56: #{tpu_custom_call.1} parent=47 // pred_fallthru
          _
        %s370 = sand.u32 %s27, 1
        %s371 = scalar_lea.sflag [#allocation6], %s370
        %s372 = sand.u32 %s117, 1
        %s373 = smul.addr %s372, 32
        %s374 = scalar_lea.vmem [#allocation7], %s373
        // Predicated region
        $region57: #{tpu_custom_call.1} parent=47 // pred_check
          %p375 = pneg %p130
        $region58: #{tpu_custom_call.1} parent=47 // pred_check_branch
          %377 = sbr.rel (%p375) target = $region60
        $region59: #{tpu_custom_call.1} parent=47 // pred_region
          %378 = dma.done %s371, 512
        $region60: #{tpu_custom_call.1} parent=47 // pred_fallthru
          _
        %s379 = sand.u32 %s49, 1
        %s380 = scalar_lea.sflag [#allocation3], %s379
        %s381 = sand.u32 %s49, 1
        %s382 = smul.addr %s381, 32
        %s383 = scalar_lea.vmem [#allocation2], %s382
        %p384 = pneg %p62
        %p385 = pneg %p59
        %s386 = sand.u32 %s27, 1
        %s387 = scalar_lea.sflag [#allocation6], %s386
        %s388 = sand.u32 %s83, 1
        %s389 = smul.addr %s388, 32
        %s390 = scalar_lea.vmem [#allocation5], %s389
        %p391 = pneg %p96
        %p392 = pneg %p93
        %s393 = sand.u32 %s27, 1
        %s394 = scalar_lea.sflag [#allocation6], %s393
        %s395 = sand.u32 %s117, 1
        %s396 = smul.addr %s395, 32
        %s397 = scalar_lea.vmem [#allocation7], %s396
        %p398 = pneg %p130
        %p399 = pneg %p127
        %p400 = pneg %p151
        %p401 = pneg %p148
        %p402 = pneg %p172
        %p403 = pneg %p169
        %p404 = pneg %p193
        %p405 = pneg %p190
        %p406 = pneg %p214
        %p407 = pneg %p211
        %p408 = pneg %p242
        %p409 = pneg %p239
        %s410 = sand.u32 %s229, 1
        %s411 = scalar_lea.sflag [#allocation4], %s410
        %s412 = sand.u32 %s229, 1
        %s413 = smul.addr %s412, 4
        %s414 = scalar_lea.vmem [#allocation8], %s413
        %s415 = ssub.s32 %s32, 1
        %p416 = scmp.gt.s32.totalorder %s415, 0
        %s417 = scalar_select %p416, %s415, 0
        %s418 = sadd.s32 %s32, 1
        %p419 = scmp.lt.s32.totalorder %s418, 1
        %s420 = scalar_select %p419, %s418, 1
        %v422 = vld [vmem:[%s356] sm:$0xff]
        %v423 = vld [vmem:[%s356 + $0x8] sm:$0xff]
        %v424 = vld [vmem:[%s356 + $0x10] sm:$0xff]
        %v425 = vld [vmem:[%s356 + $0x18] sm:$0xff]
        %p426 = scmp.gt.s32.totalorder %s32, 0
        %v427 = vld [vmem:[%s365 + $0x6] sm:$0x3]
        %v428 = vld [vmem:[%s365 + $0xe] sm:$0x3]
        %v429 = vld [vmem:[%s365 + $0x16] sm:$0x3]
        %v430 = vld [vmem:[%s365 + $0x1e] sm:$0x3]
        %s431 = scalar_select %p426, 1, 0
        %v432 = vstv %s431
        %vm433 = vcmp.eq.s32.totalorder %v432, 1
        %v434 = vsel %vm433, %v427, 0.0
        %v435 = vsel %vm433, %v428, 0.0
        %v436 = vsel %vm433, %v429, 0.0
        %v437 = vsel %vm433, %v430, 0.0
        %p438 = scmp.lt.s32.totalorder %s32, 1
        %v439 = vld [vmem:[%s374] sm:$0x3]
        %v440 = vld [vmem:[%s374 + $0x8] sm:$0x3]
        %v441 = vld [vmem:[%s374 + $0x10] sm:$0x3]
        %v442 = vld [vmem:[%s374 + $0x18] sm:$0x3]
        %s443 = scalar_select %p438, 1, 0
        %v444 = vstv %s443
        %vm445 = vcmp.eq.s32.totalorder %v444, 1
        %v446 = vsel %vm445, %v439, 0.0
        %v447 = vsel %vm445, %v440, 0.0
        %v448 = vsel %vm445, %v441, 0.0
        %v449 = vsel %vm445, %v442, 0.0
        %v454 = vrot.slane %v422, 6
        %v455 = vrot.slane %v423, 6
        %v456 = vrot.slane %v424, 6
        %v457 = vrot.slane %v425, 6
        %v466 = vrot.slane %v446, 6
        %v467 = vrot.slane %v447, 6
        %v468 = vrot.slane %v448, 6
        %v469 = vrot.slane %v449, 6
        %vm474 = vcmask 1041408
        %v475 = vsel %vm474, %v434, %v454
        %v476 = vsel %vm474, %v435, %v455
        %v477 = vsel %vm474, %v436, %v456
        %v478 = vsel %vm474, %v437, %v457
        %v479 = vsel %vm474, %v454, %v466
        %v480 = vsel %vm474, %v455, %v467
        %v481 = vsel %vm474, %v456, %v468
        %v482 = vsel %vm474, %v457, %v469
        %491 = vrot.lane.b32.xlu0 %v475, 1
        %v492 = vpop.permute.xlu0 %491
        %493 = vrot.lane.b32.xlu0 %v479, 1
        %v494 = vpop.permute.xlu0 %493
        %495 = vrot.lane.b32.xlu0 %v476, 1
        %v496 = vpop.permute.xlu0 %495
        %497 = vrot.lane.b32.xlu0 %v480, 1
        %v498 = vpop.permute.xlu0 %497
        %499 = vrot.lane.b32.xlu0 %v477, 1
        %v500 = vpop.permute.xlu0 %499
        %501 = vrot.lane.b32.xlu0 %v481, 1
        %v502 = vpop.permute.xlu0 %501
        %503 = vrot.lane.b32.xlu0 %v478, 1
        %v504 = vpop.permute.xlu0 %503
        %505 = vrot.lane.b32.xlu0 %v482, 1
        %v506 = vpop.permute.xlu0 %505
        %vm515 = vcmask 7168
        %v516 = vsel %vm515, 0.0, %v492
        %v517 = vsel %vm515, 0.0, %v494
        %v518 = vsel %vm515, 0.0, %v496
        %v519 = vsel %vm515, 0.0, %v498
        %v520 = vsel %vm515, 0.0, %v500
        %v521 = vsel %vm515, 0.0, %v502
        %v522 = vsel %vm515, 0.0, %v504
        %v523 = vsel %vm515, 0.0, %v506
        %vm524 = vcmask 138240
        %v525 = vsel %vm524, %v516, 0.0
        %v526 = vsel %vm524, %v517, 0.0
        %v527 = vsel %vm524, %v518, 0.0
        %v528 = vsel %vm524, %v519, 0.0
        %v529 = vsel %vm524, %v520, 0.0
        %v530 = vsel %vm524, %v521, 0.0
        %v531 = vsel %vm524, %v522, 0.0
        %v532 = vsel %vm524, %v523, 0.0
        %v533 = vcombine.low %v525, %v529
        %v534 = vcombine.high %v525, %v529
        %v536 = vunpack.c.l.s4 1983009808
        %v537 = vunpack.c.0.s8 %v536
        %v538 = vlaneseq
        %v539 = vshrl.u32 %v538, 7
        %v540 = vsub.s32 %v537, %v539
        %v541 = vrot.slane %v533, %v540
        %v543 = vunpack.c.l.s4 1983009808
        %v544 = vunpack.c.0.s8 %v543
        %v545 = vlaneseq
        %v546 = vshrl.u32 %v545, 7
        %v547 = vsub.s32 %v544, %v546
        %v548 = vrot.slane %v534, %v547
        %v549 = vcombine.low %v527, %v531
        %v550 = vcombine.high %v527, %v531
        %v552 = vunpack.c.l.s4 1983009808
        %v553 = vunpack.c.0.s8 %v552
        %v554 = vlaneseq
        %v555 = vshrl.u32 %v554, 7
        %v556 = vsub.s32 %v553, %v555
        %v557 = vrot.slane %v549, %v556
        %v559 = vunpack.c.l.s4 1983009808
        %v560 = vunpack.c.0.s8 %v559
        %v561 = vlaneseq
        %v562 = vshrl.u32 %v561, 7
        %v563 = vsub.s32 %v560, %v562
        %v564 = vrot.slane %v550, %v563
        %v565 = vcombine.low %v541, %v557
        %v566 = vcombine.high %v541, %v557
        %v568 = vunpack.c.l.s4 1934713408
        %v569 = vunpack.c.0.s8 %v568
        %v570 = vlaneseq
        %v571 = vshrl.u32 %v570, 7
        %v572 = vsub.s32 %v569, %v571
        %v573 = vrot.slane %v565, %v572
        %v575 = vunpack.c.l.s4 1934713408
        %v576 = vunpack.c.0.s8 %v575
        %v577 = vlaneseq
        %v578 = vshrl.u32 %v577, 7
        %v579 = vsub.s32 %v576, %v578
        %v580 = vrot.slane %v566, %v579
        %v581 = vcombine.low %v548, %v564
        %v582 = vcombine.high %v548, %v564
        %v584 = vunpack.c.l.s4 1934713408
        %v585 = vunpack.c.0.s8 %v584
        %v586 = vlaneseq
        %v587 = vshrl.u32 %v586, 7
        %v588 = vsub.s32 %v585, %v587
        %v589 = vrot.slane %v581, %v588
        %v591 = vunpack.c.l.s4 1934713408
        %v592 = vunpack.c.0.s8 %v591
        %v593 = vlaneseq
        %v594 = vshrl.u32 %v593, 7
        %v595 = vsub.s32 %v592, %v594
        %v596 = vrot.slane %v582, %v595
        %v597 = vcombine.high %v573, 0.0
        %v598 = vcombine.high %v580, 0.0
        %v599 = vcombine.high %v589, 0.0
        %v600 = vcombine.high %v596, 0.0
        %v601 = vcombine.low %v526, %v530
        %v603 = vunpack.c.l.s4 1983009808
        %v604 = vunpack.c.0.s8 %v603
        %v605 = vlaneseq
        %v606 = vshrl.u32 %v605, 7
        %v607 = vsub.s32 %v604, %v606
        %v608 = vrot.slane %v601, %v607
        %v609 = vcombine.low %v528, %v532
        %v611 = vunpack.c.l.s4 1983009808
        %v612 = vunpack.c.0.s8 %v611
        %v613 = vlaneseq
        %v614 = vshrl.u32 %v613, 7
        %v615 = vsub.s32 %v612, %v614
        %v616 = vrot.slane %v609, %v615
        %v617 = vcombine.low %v608, %v616
        %v619 = vunpack.c.l.s4 1934713408
        %v620 = vunpack.c.0.s8 %v619
        %v621 = vlaneseq
        %v622 = vshrl.u32 %v621, 7
        %v623 = vsub.s32 %v620, %v622
        %v624 = vrot.slane %v617, %v623
        %v625 = vcombine.high %v624, 0.0
        %627 = vrot.lane.b32.xlu0 %v597, 16
        %v628 = vpop.permute.xlu0 %627
        %631 = vrot.lane.b32.xlu0 %v580, 32
        %v632 = vpop.permute.xlu0 %631
        %635 = vrot.lane.b32.xlu0 %v598, 48
        %v636 = vpop.permute.xlu0 %635
        %639 = vrot.lane.b32.xlu0 %v589, 64
        %v640 = vpop.permute.xlu0 %639
        %643 = vrot.lane.b32.xlu0 %v599, 80
        %v644 = vpop.permute.xlu0 %643
        %647 = vrot.lane.b32.xlu0 %v596, 96
        %v648 = vpop.permute.xlu0 %647
        %651 = vrot.lane.b32.xlu0 %v600, 112
        %v652 = vpop.permute.xlu0 %651
        %655 = vrot.lane.b32.xlu0 %v625, 16
        %v656 = vpop.permute.xlu0 %655
        %vm658 = vcmask 130048
        %v659 = vsel %vm658, %v573, %v628
        %vm660 = vcmask 261120
        %v661 = vsel %vm660, %v659, %v632
        %vm662 = vcmask 392192
        %v663 = vsel %vm662, %v661, %v636
        %vm664 = vcmask 523264
        %v665 = vsel %vm664, %v663, %v640
        %vm666 = vcmask 654336
        %v667 = vsel %vm666, %v665, %v644
        %vm668 = vcmask 785408
        %v669 = vsel %vm668, %v667, %v648
        %vm670 = vcmask 916480
        %v671 = vsel %vm670, %v669, %v652
        %v672 = vsel %vm658, %v624, %v656
        %681 = vrot.lane.b32.xlu0 %v525, 127
        %v682 = vpop.permute.xlu0 %681
        %683 = vrot.lane.b32.xlu0 %v526, 127
        %v684 = vpop.permute.xlu0 %683
        %685 = vrot.lane.b32.xlu0 %v527, 127
        %v686 = vpop.permute.xlu0 %685
        %687 = vrot.lane.b32.xlu0 %v528, 127
        %v688 = vpop.permute.xlu0 %687
        %689 = vrot.lane.b32.xlu0 %v529, 127
        %v690 = vpop.permute.xlu0 %689
        %691 = vrot.lane.b32.xlu0 %v530, 127
        %v692 = vpop.permute.xlu0 %691
        %693 = vrot.lane.b32.xlu0 %v531, 127
        %v694 = vpop.permute.xlu0 %693
        %695 = vrot.lane.b32.xlu0 %v532, 127
        %v696 = vpop.permute.xlu0 %695
        %v705 = vcombine.low %v682, %v690
        %v706 = vcombine.high %v682, %v690
        %v708 = vunpack.c.l.s4 1983009808
        %v709 = vunpack.c.0.s8 %v708
        %v710 = vlaneseq
        %v711 = vshrl.u32 %v710, 7
        %v712 = vsub.s32 %v709, %v711
        %v713 = vrot.slane %v705, %v712
        %v715 = vunpack.c.l.s4 1983009808
        %v716 = vunpack.c.0.s8 %v715
        %v717 = vlaneseq
        %v718 = vshrl.u32 %v717, 7
        %v719 = vsub.s32 %v716, %v718
        %v720 = vrot.slane %v706, %v719
        %v721 = vcombine.low %v686, %v694
        %v722 = vcombine.high %v686, %v694
        %v724 = vunpack.c.l.s4 1983009808
        %v725 = vunpack.c.0.s8 %v724
        %v726 = vlaneseq
        %v727 = vshrl.u32 %v726, 7
        %v728 = vsub.s32 %v725, %v727
        %v729 = vrot.slane %v721, %v728
        %v731 = vunpack.c.l.s4 1983009808
        %v732 = vunpack.c.0.s8 %v731
        %v733 = vlaneseq
        %v734 = vshrl.u32 %v733, 7
        %v735 = vsub.s32 %v732, %v734
        %v736 = vrot.slane %v722, %v735
        %v737 = vcombine.low %v713, %v729
        %v738 = vcombine.high %v713, %v729
        %v740 = vunpack.c.l.s4 1934713408
        %v741 = vunpack.c.0.s8 %v740
        %v742 = vlaneseq
        %v743 = vshrl.u32 %v742, 7
        %v744 = vsub.s32 %v741, %v743
        %v745 = vrot.slane %v737, %v744
        %v747 = vunpack.c.l.s4 1934713408
        %v748 = vunpack.c.0.s8 %v747
        %v749 = vlaneseq
        %v750 = vshrl.u32 %v749, 7
        %v751 = vsub.s32 %v748, %v750
        %v752 = vrot.slane %v738, %v751
        %v753 = vcombine.low %v720, %v736
        %v754 = vcombine.high %v720, %v736
        %v756 = vunpack.c.l.s4 1934713408
        %v757 = vunpack.c.0.s8 %v756
        %v758 = vlaneseq
        %v759 = vshrl.u32 %v758, 7
        %v760 = vsub.s32 %v757, %v759
        %v761 = vrot.slane %v753, %v760
        %v763 = vunpack.c.l.s4 1934713408
        %v764 = vunpack.c.0.s8 %v763
        %v765 = vlaneseq
        %v766 = vshrl.u32 %v765, 7
        %v767 = vsub.s32 %v764, %v766
        %v768 = vrot.slane %v754, %v767
        %v769 = vcombine.high %v745, 0.0
        %v770 = vcombine.high %v752, 0.0
        %v771 = vcombine.high %v761, 0.0
        %v772 = vcombine.high %v768, 0.0
        %v773 = vcombine.low %v684, %v692
        %v775 = vunpack.c.l.s4 1983009808
        %v776 = vunpack.c.0.s8 %v775
        %v777 = vlaneseq
        %v778 = vshrl.u32 %v777, 7
        %v779 = vsub.s32 %v776, %v778
        %v780 = vrot.slane %v773, %v779
        %v781 = vcombine.low %v688, %v696
        %v783 = vunpack.c.l.s4 1983009808
        %v784 = vunpack.c.0.s8 %v783
        %v785 = vlaneseq
        %v786 = vshrl.u32 %v785, 7
        %v787 = vsub.s32 %v784, %v786
        %v788 = vrot.slane %v781, %v787
        %v789 = vcombine.low %v780, %v788
        %v791 = vunpack.c.l.s4 1934713408
        %v792 = vunpack.c.0.s8 %v791
        %v793 = vlaneseq
        %v794 = vshrl.u32 %v793, 7
        %v795 = vsub.s32 %v792, %v794
        %v796 = vrot.slane %v789, %v795
        %v797 = vcombine.high %v796, 0.0
        %799 = vrot.lane.b32.xlu0 %v769, 16
        %v800 = vpop.permute.xlu0 %799
        %803 = vrot.lane.b32.xlu0 %v752, 32
        %v804 = vpop.permute.xlu0 %803
        %807 = vrot.lane.b32.xlu0 %v770, 48
        %v808 = vpop.permute.xlu0 %807
        %811 = vrot.lane.b32.xlu0 %v761, 64
        %v812 = vpop.permute.xlu0 %811
        %815 = vrot.lane.b32.xlu0 %v771, 80
        %v816 = vpop.permute.xlu0 %815
        %819 = vrot.lane.b32.xlu0 %v768, 96
        %v820 = vpop.permute.xlu0 %819
        %823 = vrot.lane.b32.xlu0 %v772, 112
        %v824 = vpop.permute.xlu0 %823
        %827 = vrot.lane.b32.xlu0 %v797, 16
        %v828 = vpop.permute.xlu0 %827
        %v830 = vsel %vm658, %v745, %v800
        %v831 = vsel %vm660, %v830, %v804
        %v832 = vsel %vm662, %v831, %v808
        %v833 = vsel %vm664, %v832, %v812
        %v834 = vsel %vm666, %v833, %v816
        %v835 = vsel %vm668, %v834, %v820
        %v836 = vsel %vm670, %v835, %v824
        %v837 = vsel %vm658, %v796, %v828
        %838 = vrot.lane.b32.xlu0 %v525, 126
        %v839 = vpop.permute.xlu0 %838
        %840 = vrot.lane.b32.xlu0 %v526, 126
        %v841 = vpop.permute.xlu0 %840
        %842 = vrot.lane.b32.xlu0 %v527, 126
        %v843 = vpop.permute.xlu0 %842
        %844 = vrot.lane.b32.xlu0 %v528, 126
        %v845 = vpop.permute.xlu0 %844
        %846 = vrot.lane.b32.xlu0 %v529, 126
        %v847 = vpop.permute.xlu0 %846
        %848 = vrot.lane.b32.xlu0 %v530, 126
        %v849 = vpop.permute.xlu0 %848
        %850 = vrot.lane.b32.xlu0 %v531, 126
        %v851 = vpop.permute.xlu0 %850
        %852 = vrot.lane.b32.xlu0 %v532, 126
        %v853 = vpop.permute.xlu0 %852
        %v862 = vcombine.low %v839, %v847
        %v863 = vcombine.high %v839, %v847
        %v865 = vunpack.c.l.s4 1983009808
        %v866 = vunpack.c.0.s8 %v865
        %v867 = vlaneseq
        %v868 = vshrl.u32 %v867, 7
        %v869 = vsub.s32 %v866, %v868
        %v870 = vrot.slane %v862, %v869
        %v872 = vunpack.c.l.s4 1983009808
        %v873 = vunpack.c.0.s8 %v872
        %v874 = vlaneseq
        %v875 = vshrl.u32 %v874, 7
        %v876 = vsub.s32 %v873, %v875
        %v877 = vrot.slane %v863, %v876
        %v878 = vcombine.low %v843, %v851
        %v879 = vcombine.high %v843, %v851
        %v881 = vunpack.c.l.s4 1983009808
        %v882 = vunpack.c.0.s8 %v881
        %v883 = vlaneseq
        %v884 = vshrl.u32 %v883, 7
        %v885 = vsub.s32 %v882, %v884
        %v886 = vrot.slane %v878, %v885
        %v888 = vunpack.c.l.s4 1983009808
        %v889 = vunpack.c.0.s8 %v888
        %v890 = vlaneseq
        %v891 = vshrl.u32 %v890, 7
        %v892 = vsub.s32 %v889, %v891
        %v893 = vrot.slane %v879, %v892
        %v894 = vcombine.low %v870, %v886
        %v895 = vcombine.high %v870, %v886
        %v897 = vunpack.c.l.s4 1934713408
        %v898 = vunpack.c.0.s8 %v897
        %v899 = vlaneseq
        %v900 = vshrl.u32 %v899, 7
        %v901 = vsub.s32 %v898, %v900
        %v902 = vrot.slane %v894, %v901
        %v904 = vunpack.c.l.s4 1934713408
        %v905 = vunpack.c.0.s8 %v904
        %v906 = vlaneseq
        %v907 = vshrl.u32 %v906, 7
        %v908 = vsub.s32 %v905, %v907
        %v909 = vrot.slane %v895, %v908
        %v910 = vcombine.low %v877, %v893
        %v911 = vcombine.high %v877, %v893
        %v913 = vunpack.c.l.s4 1934713408
        %v914 = vunpack.c.0.s8 %v913
        %v915 = vlaneseq
        %v916 = vshrl.u32 %v915, 7
        %v917 = vsub.s32 %v914, %v916
        %v918 = vrot.slane %v910, %v917
        %v920 = vunpack.c.l.s4 1934713408
        %v921 = vunpack.c.0.s8 %v920
        %v922 = vlaneseq
        %v923 = vshrl.u32 %v922, 7
        %v924 = vsub.s32 %v921, %v923
        %v925 = vrot.slane %v911, %v924
        %v926 = vcombine.high %v902, 0.0
        %v927 = vcombine.high %v909, 0.0
        %v928 = vcombine.high %v918, 0.0
        %v929 = vcombine.high %v925, 0.0
        %v930 = vcombine.low %v841, %v849
        %v932 = vunpack.c.l.s4 1983009808
        %v933 = vunpack.c.0.s8 %v932
        %v934 = vlaneseq
        %v935 = vshrl.u32 %v934, 7
        %v936 = vsub.s32 %v933, %v935
        %v937 = vrot.slane %v930, %v936
        %v938 = vcombine.low %v845, %v853
        %v940 = vunpack.c.l.s4 1983009808
        %v941 = vunpack.c.0.s8 %v940
        %v942 = vlaneseq
        %v943 = vshrl.u32 %v942, 7
        %v944 = vsub.s32 %v941, %v943
        %v945 = vrot.slane %v938, %v944
        %v946 = vcombine.low %v937, %v945
        %v948 = vunpack.c.l.s4 1934713408
        %v949 = vunpack.c.0.s8 %v948
        %v950 = vlaneseq
        %v951 = vshrl.u32 %v950, 7
        %v952 = vsub.s32 %v949, %v951
        %v953 = vrot.slane %v946, %v952
        %v954 = vcombine.high %v953, 0.0
        %956 = vrot.lane.b32.xlu0 %v926, 16
        %v957 = vpop.permute.xlu0 %956
        %960 = vrot.lane.b32.xlu0 %v909, 32
        %v961 = vpop.permute.xlu0 %960
        %964 = vrot.lane.b32.xlu0 %v927, 48
        %v965 = vpop.permute.xlu0 %964
        %968 = vrot.lane.b32.xlu0 %v918, 64
        %v969 = vpop.permute.xlu0 %968
        %972 = vrot.lane.b32.xlu0 %v928, 80
        %v973 = vpop.permute.xlu0 %972
        %976 = vrot.lane.b32.xlu0 %v925, 96
        %v977 = vpop.permute.xlu0 %976
        %980 = vrot.lane.b32.xlu0 %v929, 112
        %v981 = vpop.permute.xlu0 %980
        %984 = vrot.lane.b32.xlu0 %v954, 16
        %v985 = vpop.permute.xlu0 %984
        %v987 = vsel %vm658, %v902, %v957
        %v988 = vsel %vm660, %v987, %v961
        %v989 = vsel %vm662, %v988, %v965
        %v990 = vsel %vm664, %v989, %v969
        %v991 = vsel %vm666, %v990, %v973
        %v992 = vsel %vm668, %v991, %v977
        %v993 = vsel %vm670, %v992, %v981
        %v994 = vsel %vm658, %v953, %v985
        %vm995 = vcmask 1046528
        %v996 = vrot.slane %v525, 1
        %v997 = vrot.slane %v526, 1
        %v998 = vsel %vm995, %v996, %v997
        %v999 = vrot.slane %v527, 1
        %v1000 = vrot.slane %v528, 1
        %v1001 = vsel %vm995, %v999, %v1000
        %v1002 = vrot.slane %v529, 1
        %v1003 = vrot.slane %v530, 1
        %v1004 = vsel %vm995, %v1002, %v1003
        %v1005 = vrot.slane %v531, 1
        %v1006 = vrot.slane %v532, 1
        %v1007 = vsel %vm995, %v1005, %v1006
        %v1016 = vcombine.low %v998, %v1004
        %v1017 = vcombine.high %v998, %v1004
        %v1019 = vunpack.c.l.s4 1983009808
        %v1020 = vunpack.c.0.s8 %v1019
        %v1021 = vlaneseq
        %v1022 = vshrl.u32 %v1021, 7
        %v1023 = vsub.s32 %v1020, %v1022
        %v1024 = vrot.slane %v1016, %v1023
        %v1026 = vunpack.c.l.s4 1983009808
        %v1027 = vunpack.c.0.s8 %v1026
        %v1028 = vlaneseq
        %v1029 = vshrl.u32 %v1028, 7
        %v1030 = vsub.s32 %v1027, %v1029
        %v1031 = vrot.slane %v1017, %v1030
        %v1032 = vcombine.low %v1001, %v1007
        %v1033 = vcombine.high %v1001, %v1007
        %v1035 = vunpack.c.l.s4 1983009808
        %v1036 = vunpack.c.0.s8 %v1035
        %v1037 = vlaneseq
        %v1038 = vshrl.u32 %v1037, 7
        %v1039 = vsub.s32 %v1036, %v1038
        %v1040 = vrot.slane %v1032, %v1039
        %v1042 = vunpack.c.l.s4 1983009808
        %v1043 = vunpack.c.0.s8 %v1042
        %v1044 = vlaneseq
        %v1045 = vshrl.u32 %v1044, 7
        %v1046 = vsub.s32 %v1043, %v1045
        %v1047 = vrot.slane %v1033, %v1046
        %v1048 = vcombine.low %v1024, %v1040
        %v1049 = vcombine.high %v1024, %v1040
        %v1051 = vunpack.c.l.s4 1934713408
        %v1052 = vunpack.c.0.s8 %v1051
        %v1053 = vlaneseq
        %v1054 = vshrl.u32 %v1053, 7
        %v1055 = vsub.s32 %v1052, %v1054
        %v1056 = vrot.slane %v1048, %v1055
        %v1058 = vunpack.c.l.s4 1934713408
        %v1059 = vunpack.c.0.s8 %v1058
        %v1060 = vlaneseq
        %v1061 = vshrl.u32 %v1060, 7
        %v1062 = vsub.s32 %v1059, %v1061
        %v1063 = vrot.slane %v1049, %v1062
        %v1064 = vcombine.low %v1031, %v1047
        %v1065 = vcombine.high %v1031, %v1047
        %v1067 = vunpack.c.l.s4 1934713408
        %v1068 = vunpack.c.0.s8 %v1067
        %v1069 = vlaneseq
        %v1070 = vshrl.u32 %v1069, 7
        %v1071 = vsub.s32 %v1068, %v1070
        %v1072 = vrot.slane %v1064, %v1071
        %v1074 = vunpack.c.l.s4 1934713408
        %v1075 = vunpack.c.0.s8 %v1074
        %v1076 = vlaneseq
        %v1077 = vshrl.u32 %v1076, 7
        %v1078 = vsub.s32 %v1075, %v1077
        %v1079 = vrot.slane %v1065, %v1078
        %v1080 = vcombine.high %v1056, 0.0
        %v1081 = vcombine.high %v1063, 0.0
        %v1082 = vcombine.high %v1072, 0.0
        %v1083 = vcombine.high %v1079, 0.0
        %v1084 = vcombine.low %v997, %v1003
        %v1086 = vunpack.c.l.s4 1983009808
        %v1087 = vunpack.c.0.s8 %v1086
        %v1088 = vlaneseq
        %v1089 = vshrl.u32 %v1088, 7
        %v1090 = vsub.s32 %v1087, %v1089
        %v1091 = vrot.slane %v1084, %v1090
        %v1092 = vcombine.low %v1000, %v1006
        %v1094 = vunpack.c.l.s4 1983009808
        %v1095 = vunpack.c.0.s8 %v1094
        %v1096 = vlaneseq
        %v1097 = vshrl.u32 %v1096, 7
        %v1098 = vsub.s32 %v1095, %v1097
        %v1099 = vrot.slane %v1092, %v1098
        %v1100 = vcombine.low %v1091, %v1099
        %v1102 = vunpack.c.l.s4 1934713408
        %v1103 = vunpack.c.0.s8 %v1102
        %v1104 = vlaneseq
        %v1105 = vshrl.u32 %v1104, 7
        %v1106 = vsub.s32 %v1103, %v1105
        %v1107 = vrot.slane %v1100, %v1106
        %v1108 = vcombine.high %v1107, 0.0
        %1110 = vrot.lane.b32.xlu0 %v1080, 16
        %v1111 = vpop.permute.xlu0 %1110
        %1114 = vrot.lane.b32.xlu0 %v1063, 32
        %v1115 = vpop.permute.xlu0 %1114
        %1118 = vrot.lane.b32.xlu0 %v1081, 48
        %v1119 = vpop.permute.xlu0 %1118
        %1122 = vrot.lane.b32.xlu0 %v1072, 64
        %v1123 = vpop.permute.xlu0 %1122
        %1126 = vrot.lane.b32.xlu0 %v1082, 80
        %v1127 = vpop.permute.xlu0 %1126
        %1130 = vrot.lane.b32.xlu0 %v1079, 96
        %v1131 = vpop.permute.xlu0 %1130
        %1134 = vrot.lane.b32.xlu0 %v1083, 112
        %v1135 = vpop.permute.xlu0 %1134
        %1138 = vrot.lane.b32.xlu0 %v1108, 16
        %v1139 = vpop.permute.xlu0 %1138
        %v1141 = vsel %vm658, %v1056, %v1111
        %v1142 = vsel %vm660, %v1141, %v1115
        %v1143 = vsel %vm662, %v1142, %v1119
        %v1144 = vsel %vm664, %v1143, %v1123
        %v1145 = vsel %vm666, %v1144, %v1127
        %v1146 = vsel %vm668, %v1145, %v1131
        %v1147 = vsel %vm670, %v1146, %v1135
        %v1148 = vsel %vm658, %v1107, %v1139
        %1149 = vrot.lane.b32.xlu0 %v998, 127
        %v1150 = vpop.permute.xlu0 %1149
        %1151 = vrot.lane.b32.xlu0 %v997, 127
        %v1152 = vpop.permute.xlu0 %1151
        %1153 = vrot.lane.b32.xlu0 %v1001, 127
        %v1154 = vpop.permute.xlu0 %1153
        %1155 = vrot.lane.b32.xlu0 %v1000, 127
        %v1156 = vpop.permute.xlu0 %1155
        %1157 = vrot.lane.b32.xlu0 %v1004, 127
        %v1158 = vpop.permute.xlu0 %1157
        %1159 = vrot.lane.b32.xlu0 %v1003, 127
        %v1160 = vpop.permute.xlu0 %1159
        %1161 = vrot.lane.b32.xlu0 %v1007, 127
        %v1162 = vpop.permute.xlu0 %1161
        %1163 = vrot.lane.b32.xlu0 %v1006, 127
        %v1164 = vpop.permute.xlu0 %1163
        %v1173 = vcombine.low %v1150, %v1158
        %v1174 = vcombine.high %v1150, %v1158
        %v1176 = vunpack.c.l.s4 1983009808
        %v1177 = vunpack.c.0.s8 %v1176
        %v1178 = vlaneseq
        %v1179 = vshrl.u32 %v1178, 7
        %v1180 = vsub.s32 %v1177, %v1179
        %v1181 = vrot.slane %v1173, %v1180
        %v1183 = vunpack.c.l.s4 1983009808
        %v1184 = vunpack.c.0.s8 %v1183
        %v1185 = vlaneseq
        %v1186 = vshrl.u32 %v1185, 7
        %v1187 = vsub.s32 %v1184, %v1186
        %v1188 = vrot.slane %v1174, %v1187
        %v1189 = vcombine.low %v1154, %v1162
        %v1190 = vcombine.high %v1154, %v1162
        %v1192 = vunpack.c.l.s4 1983009808
        %v1193 = vunpack.c.0.s8 %v1192
        %v1194 = vlaneseq
        %v1195 = vshrl.u32 %v1194, 7
        %v1196 = vsub.s32 %v1193, %v1195
        %v1197 = vrot.slane %v1189, %v1196
        %v1199 = vunpack.c.l.s4 1983009808
        %v1200 = vunpack.c.0.s8 %v1199
        %v1201 = vlaneseq
        %v1202 = vshrl.u32 %v1201, 7
        %v1203 = vsub.s32 %v1200, %v1202
        %v1204 = vrot.slane %v1190, %v1203
        %v1205 = vcombine.low %v1181, %v1197
        %v1206 = vcombine.high %v1181, %v1197
        %v1208 = vunpack.c.l.s4 1934713408
        %v1209 = vunpack.c.0.s8 %v1208
        %v1210 = vlaneseq
        %v1211 = vshrl.u32 %v1210, 7
        %v1212 = vsub.s32 %v1209, %v1211
        %v1213 = vrot.slane %v1205, %v1212
        %v1215 = vunpack.c.l.s4 1934713408
        %v1216 = vunpack.c.0.s8 %v1215
        %v1217 = vlaneseq
        %v1218 = vshrl.u32 %v1217, 7
        %v1219 = vsub.s32 %v1216, %v1218
        %v1220 = vrot.slane %v1206, %v1219
        %v1221 = vcombine.low %v1188, %v1204
        %v1222 = vcombine.high %v1188, %v1204
        %v1224 = vunpack.c.l.s4 1934713408
        %v1225 = vunpack.c.0.s8 %v1224
        %v1226 = vlaneseq
        %v1227 = vshrl.u32 %v1226, 7
        %v1228 = vsub.s32 %v1225, %v1227
        %v1229 = vrot.slane %v1221, %v1228
        %v1231 = vunpack.c.l.s4 1934713408
        %v1232 = vunpack.c.0.s8 %v1231
        %v1233 = vlaneseq
        %v1234 = vshrl.u32 %v1233, 7
        %v1235 = vsub.s32 %v1232, %v1234
        %v1236 = vrot.slane %v1222, %v1235
        %v1237 = vcombine.high %v1213, 0.0
        %v1238 = vcombine.high %v1220, 0.0
        %v1239 = vcombine.high %v1229, 0.0
        %v1240 = vcombine.high %v1236, 0.0
        %v1241 = vcombine.low %v1152, %v1160
        %v1243 = vunpack.c.l.s4 1983009808
        %v1244 = vunpack.c.0.s8 %v1243
        %v1245 = vlaneseq
        %v1246 = vshrl.u32 %v1245, 7
        %v1247 = vsub.s32 %v1244, %v1246
        %v1248 = vrot.slane %v1241, %v1247
        %v1249 = vcombine.low %v1156, %v1164
        %v1251 = vunpack.c.l.s4 1983009808
        %v1252 = vunpack.c.0.s8 %v1251
        %v1253 = vlaneseq
        %v1254 = vshrl.u32 %v1253, 7
        %v1255 = vsub.s32 %v1252, %v1254
        %v1256 = vrot.slane %v1249, %v1255
        %v1257 = vcombine.low %v1248, %v1256
        %v1259 = vunpack.c.l.s4 1934713408
        %v1260 = vunpack.c.0.s8 %v1259
        %v1261 = vlaneseq
        %v1262 = vshrl.u32 %v1261, 7
        %v1263 = vsub.s32 %v1260, %v1262
        %v1264 = vrot.slane %v1257, %v1263
        %v1265 = vcombine.high %v1264, 0.0
        %1267 = vrot.lane.b32.xlu0 %v1237, 16
        %v1268 = vpop.permute.xlu0 %1267
        %1271 = vrot.lane.b32.xlu0 %v1220, 32
        %v1272 = vpop.permute.xlu0 %1271
        %1275 = vrot.lane.b32.xlu0 %v1238, 48
        %v1276 = vpop.permute.xlu0 %1275
        %1279 = vrot.lane.b32.xlu0 %v1229, 64
        %v1280 = vpop.permute.xlu0 %1279
        %1283 = vrot.lane.b32.xlu0 %v1239, 80
        %v1284 = vpop.permute.xlu0 %1283
        %1287 = vrot.lane.b32.xlu0 %v1236, 96
        %v1288 = vpop.permute.xlu0 %1287
        %1291 = vrot.lane.b32.xlu0 %v1240, 112
        %v1292 = vpop.permute.xlu0 %1291
        %1295 = vrot.lane.b32.xlu0 %v1265, 16
        %v1296 = vpop.permute.xlu0 %1295
        %v1298 = vsel %vm658, %v1213, %v1268
        %v1299 = vsel %vm660, %v1298, %v1272
        %v1300 = vsel %vm662, %v1299, %v1276
        %v1301 = vsel %vm664, %v1300, %v1280
        %v1302 = vsel %vm666, %v1301, %v1284
        %v1303 = vsel %vm668, %v1302, %v1288
        %v1304 = vsel %vm670, %v1303, %v1292
        %v1305 = vsel %vm658, %v1264, %v1296
        %1306 = vrot.lane.b32.xlu0 %v998, 126
        %v1307 = vpop.permute.xlu0 %1306
        %1308 = vrot.lane.b32.xlu0 %v997, 126
        %v1309 = vpop.permute.xlu0 %1308
        %1310 = vrot.lane.b32.xlu0 %v1001, 126
        %v1311 = vpop.permute.xlu0 %1310
        %1312 = vrot.lane.b32.xlu0 %v1000, 126
        %v1313 = vpop.permute.xlu0 %1312
        %1314 = vrot.lane.b32.xlu0 %v1004, 126
        %v1315 = vpop.permute.xlu0 %1314
        %1316 = vrot.lane.b32.xlu0 %v1003, 126
        %v1317 = vpop.permute.xlu0 %1316
        %1318 = vrot.lane.b32.xlu0 %v1007, 126
        %v1319 = vpop.permute.xlu0 %1318
        %1320 = vrot.lane.b32.xlu0 %v1006, 126
        %v1321 = vpop.permute.xlu0 %1320
        %v1330 = vcombine.low %v1307, %v1315
        %v1331 = vcombine.high %v1307, %v1315
        %v1333 = vunpack.c.l.s4 1983009808
        %v1334 = vunpack.c.0.s8 %v1333
        %v1335 = vlaneseq
        %v1336 = vshrl.u32 %v1335, 7
        %v1337 = vsub.s32 %v1334, %v1336
        %v1338 = vrot.slane %v1330, %v1337
        %v1340 = vunpack.c.l.s4 1983009808
        %v1341 = vunpack.c.0.s8 %v1340
        %v1342 = vlaneseq
        %v1343 = vshrl.u32 %v1342, 7
        %v1344 = vsub.s32 %v1341, %v1343
        %v1345 = vrot.slane %v1331, %v1344
        %v1346 = vcombine.low %v1311, %v1319
        %v1347 = vcombine.high %v1311, %v1319
        %v1349 = vunpack.c.l.s4 1983009808
        %v1350 = vunpack.c.0.s8 %v1349
        %v1351 = vlaneseq
        %v1352 = vshrl.u32 %v1351, 7
        %v1353 = vsub.s32 %v1350, %v1352
        %v1354 = vrot.slane %v1346, %v1353
        %v1356 = vunpack.c.l.s4 1983009808
        %v1357 = vunpack.c.0.s8 %v1356
        %v1358 = vlaneseq
        %v1359 = vshrl.u32 %v1358, 7
        %v1360 = vsub.s32 %v1357, %v1359
        %v1361 = vrot.slane %v1347, %v1360
        %v1362 = vcombine.low %v1338, %v1354
        %v1363 = vcombine.high %v1338, %v1354
        %v1365 = vunpack.c.l.s4 1934713408
        %v1366 = vunpack.c.0.s8 %v1365
        %v1367 = vlaneseq
        %v1368 = vshrl.u32 %v1367, 7
        %v1369 = vsub.s32 %v1366, %v1368
        %v1370 = vrot.slane %v1362, %v1369
        %v1372 = vunpack.c.l.s4 1934713408
        %v1373 = vunpack.c.0.s8 %v1372
        %v1374 = vlaneseq
        %v1375 = vshrl.u32 %v1374, 7
        %v1376 = vsub.s32 %v1373, %v1375
        %v1377 = vrot.slane %v1363, %v1376
        %v1378 = vcombine.low %v1345, %v1361
        %v1379 = vcombine.high %v1345, %v1361
        %v1381 = vunpack.c.l.s4 1934713408
        %v1382 = vunpack.c.0.s8 %v1381
        %v1383 = vlaneseq
        %v1384 = vshrl.u32 %v1383, 7
        %v1385 = vsub.s32 %v1382, %v1384
        %v1386 = vrot.slane %v1378, %v1385
        %v1388 = vunpack.c.l.s4 1934713408
        %v1389 = vunpack.c.0.s8 %v1388
        %v1390 = vlaneseq
        %v1391 = vshrl.u32 %v1390, 7
        %v1392 = vsub.s32 %v1389, %v1391
        %v1393 = vrot.slane %v1379, %v1392
        %v1394 = vcombine.high %v1370, 0.0
        %v1395 = vcombine.high %v1377, 0.0
        %v1396 = vcombine.high %v1386, 0.0
        %v1397 = vcombine.high %v1393, 0.0
        %v1398 = vcombine.low %v1309, %v1317
        %v1400 = vunpack.c.l.s4 1983009808
        %v1401 = vunpack.c.0.s8 %v1400
        %v1402 = vlaneseq
        %v1403 = vshrl.u32 %v1402, 7
        %v1404 = vsub.s32 %v1401, %v1403
        %v1405 = vrot.slane %v1398, %v1404
        %v1406 = vcombine.low %v1313, %v1321
        %v1408 = vunpack.c.l.s4 1983009808
        %v1409 = vunpack.c.0.s8 %v1408
        %v1410 = vlaneseq
        %v1411 = vshrl.u32 %v1410, 7
        %v1412 = vsub.s32 %v1409, %v1411
        %v1413 = vrot.slane %v1406, %v1412
        %v1414 = vcombine.low %v1405, %v1413
        %v1416 = vunpack.c.l.s4 1934713408
        %v1417 = vunpack.c.0.s8 %v1416
        %v1418 = vlaneseq
        %v1419 = vshrl.u32 %v1418, 7
        %v1420 = vsub.s32 %v1417, %v1419
        %v1421 = vrot.slane %v1414, %v1420
        %v1422 = vcombine.high %v1421, 0.0
        %1424 = vrot.lane.b32.xlu0 %v1394, 16
        %v1425 = vpop.permute.xlu0 %1424
        %1428 = vrot.lane.b32.xlu0 %v1377, 32
        %v1429 = vpop.permute.xlu0 %1428
        %1432 = vrot.lane.b32.xlu0 %v1395, 48
        %v1433 = vpop.permute.xlu0 %1432
        %1436 = vrot.lane.b32.xlu0 %v1386, 64
        %v1437 = vpop.permute.xlu0 %1436
        %1440 = vrot.lane.b32.xlu0 %v1396, 80
        %v1441 = vpop.permute.xlu0 %1440
        %1444 = vrot.lane.b32.xlu0 %v1393, 96
        %v1445 = vpop.permute.xlu0 %1444
        %1448 = vrot.lane.b32.xlu0 %v1397, 112
        %v1449 = vpop.permute.xlu0 %1448
        %1452 = vrot.lane.b32.xlu0 %v1422, 16
        %v1453 = vpop.permute.xlu0 %1452
        %v1455 = vsel %vm658, %v1370, %v1425
        %v1456 = vsel %vm660, %v1455, %v1429
        %v1457 = vsel %vm662, %v1456, %v1433
        %v1458 = vsel %vm664, %v1457, %v1437
        %v1459 = vsel %vm666, %v1458, %v1441
        %v1460 = vsel %vm668, %v1459, %v1445
        %v1461 = vsel %vm670, %v1460, %v1449
        %v1462 = vsel %vm658, %v1421, %v1453
        %vm1463 = vcmask 1045504
        %v1464 = vrot.slane %v525, 2
        %v1465 = vrot.slane %v526, 2
        %v1466 = vsel %vm1463, %v1464, %v1465
        %v1467 = vrot.slane %v527, 2
        %v1468 = vrot.slane %v528, 2
        %v1469 = vsel %vm1463, %v1467, %v1468
        %v1470 = vrot.slane %v529, 2
        %v1471 = vrot.slane %v530, 2
        %v1472 = vsel %vm1463, %v1470, %v1471
        %v1473 = vrot.slane %v531, 2
        %v1474 = vrot.slane %v532, 2
        %v1475 = vsel %vm1463, %v1473, %v1474
        %v1484 = vcombine.low %v1466, %v1472
        %v1485 = vcombine.high %v1466, %v1472
        %v1487 = vunpack.c.l.s4 1983009808
        %v1488 = vunpack.c.0.s8 %v1487
        %v1489 = vlaneseq
        %v1490 = vshrl.u32 %v1489, 7
        %v1491 = vsub.s32 %v1488, %v1490
        %v1492 = vrot.slane %v1484, %v1491
        %v1494 = vunpack.c.l.s4 1983009808
        %v1495 = vunpack.c.0.s8 %v1494
        %v1496 = vlaneseq
        %v1497 = vshrl.u32 %v1496, 7
        %v1498 = vsub.s32 %v1495, %v1497
        %v1499 = vrot.slane %v1485, %v1498
        %v1500 = vcombine.low %v1469, %v1475
        %v1501 = vcombine.high %v1469, %v1475
        %v1503 = vunpack.c.l.s4 1983009808
        %v1504 = vunpack.c.0.s8 %v1503
        %v1505 = vlaneseq
        %v1506 = vshrl.u32 %v1505, 7
        %v1507 = vsub.s32 %v1504, %v1506
        %v1508 = vrot.slane %v1500, %v1507
        %v1510 = vunpack.c.l.s4 1983009808
        %v1511 = vunpack.c.0.s8 %v1510
        %v1512 = vlaneseq
        %v1513 = vshrl.u32 %v1512, 7
        %v1514 = vsub.s32 %v1511, %v1513
        %v1515 = vrot.slane %v1501, %v1514
        %v1516 = vcombine.low %v1492, %v1508
        %v1517 = vcombine.high %v1492, %v1508
        %v1519 = vunpack.c.l.s4 1934713408
        %v1520 = vunpack.c.0.s8 %v1519
        %v1521 = vlaneseq
        %v1522 = vshrl.u32 %v1521, 7
        %v1523 = vsub.s32 %v1520, %v1522
        %v1524 = vrot.slane %v1516, %v1523
        %v1526 = vunpack.c.l.s4 1934713408
        %v1527 = vunpack.c.0.s8 %v1526
        %v1528 = vlaneseq
        %v1529 = vshrl.u32 %v1528, 7
        %v1530 = vsub.s32 %v1527, %v1529
        %v1531 = vrot.slane %v1517, %v1530
        %v1532 = vcombine.low %v1499, %v1515
        %v1533 = vcombine.high %v1499, %v1515
        %v1535 = vunpack.c.l.s4 1934713408
        %v1536 = vunpack.c.0.s8 %v1535
        %v1537 = vlaneseq
        %v1538 = vshrl.u32 %v1537, 7
        %v1539 = vsub.s32 %v1536, %v1538
        %v1540 = vrot.slane %v1532, %v1539
        %v1542 = vunpack.c.l.s4 1934713408
        %v1543 = vunpack.c.0.s8 %v1542
        %v1544 = vlaneseq
        %v1545 = vshrl.u32 %v1544, 7
        %v1546 = vsub.s32 %v1543, %v1545
        %v1547 = vrot.slane %v1533, %v1546
        %v1548 = vcombine.high %v1524, 0.0
        %v1549 = vcombine.high %v1531, 0.0
        %v1550 = vcombine.high %v1540, 0.0
        %v1551 = vcombine.high %v1547, 0.0
        %v1552 = vcombine.low %v1465, %v1471
        %v1554 = vunpack.c.l.s4 1983009808
        %v1555 = vunpack.c.0.s8 %v1554
        %v1556 = vlaneseq
        %v1557 = vshrl.u32 %v1556, 7
        %v1558 = vsub.s32 %v1555, %v1557
        %v1559 = vrot.slane %v1552, %v1558
        %v1560 = vcombine.low %v1468, %v1474
        %v1562 = vunpack.c.l.s4 1983009808
        %v1563 = vunpack.c.0.s8 %v1562
        %v1564 = vlaneseq
        %v1565 = vshrl.u32 %v1564, 7
        %v1566 = vsub.s32 %v1563, %v1565
        %v1567 = vrot.slane %v1560, %v1566
        %v1568 = vcombine.low %v1559, %v1567
        %v1570 = vunpack.c.l.s4 1934713408
        %v1571 = vunpack.c.0.s8 %v1570
        %v1572 = vlaneseq
        %v1573 = vshrl.u32 %v1572, 7
        %v1574 = vsub.s32 %v1571, %v1573
        %v1575 = vrot.slane %v1568, %v1574
        %v1576 = vcombine.high %v1575, 0.0
        %1578 = vrot.lane.b32.xlu0 %v1548, 16
        %v1579 = vpop.permute.xlu0 %1578
        %1582 = vrot.lane.b32.xlu0 %v1531, 32
        %v1583 = vpop.permute.xlu0 %1582
        %1586 = vrot.lane.b32.xlu0 %v1549, 48
        %v1587 = vpop.permute.xlu0 %1586
        %1590 = vrot.lane.b32.xlu0 %v1540, 64
        %v1591 = vpop.permute.xlu0 %1590
        %1594 = vrot.lane.b32.xlu0 %v1550, 80
        %v1595 = vpop.permute.xlu0 %1594
        %1598 = vrot.lane.b32.xlu0 %v1547, 96
        %v1599 = vpop.permute.xlu0 %1598
        %1602 = vrot.lane.b32.xlu0 %v1551, 112
        %v1603 = vpop.permute.xlu0 %1602
        %1606 = vrot.lane.b32.xlu0 %v1576, 16
        %v1607 = vpop.permute.xlu0 %1606
        %v1609 = vsel %vm658, %v1524, %v1579
        %v1610 = vsel %vm660, %v1609, %v1583
        %v1611 = vsel %vm662, %v1610, %v1587
        %v1612 = vsel %vm664, %v1611, %v1591
        %v1613 = vsel %vm666, %v1612, %v1595
        %v1614 = vsel %vm668, %v1613, %v1599
        %v1615 = vsel %vm670, %v1614, %v1603
        %v1616 = vsel %vm658, %v1575, %v1607
        %1617 = vrot.lane.b32.xlu0 %v1466, 127
        %v1618 = vpop.permute.xlu0 %1617
        %1619 = vrot.lane.b32.xlu0 %v1465, 127
        %v1620 = vpop.permute.xlu0 %1619
        %1621 = vrot.lane.b32.xlu0 %v1469, 127
        %v1622 = vpop.permute.xlu0 %1621
        %1623 = vrot.lane.b32.xlu0 %v1468, 127
        %v1624 = vpop.permute.xlu0 %1623
        %1625 = vrot.lane.b32.xlu0 %v1472, 127
        %v1626 = vpop.permute.xlu0 %1625
        %1627 = vrot.lane.b32.xlu0 %v1471, 127
        %v1628 = vpop.permute.xlu0 %1627
        %1629 = vrot.lane.b32.xlu0 %v1475, 127
        %v1630 = vpop.permute.xlu0 %1629
        %1631 = vrot.lane.b32.xlu0 %v1474, 127
        %v1632 = vpop.permute.xlu0 %1631
        %v1641 = vcombine.low %v1618, %v1626
        %v1642 = vcombine.high %v1618, %v1626
        %v1644 = vunpack.c.l.s4 1983009808
        %v1645 = vunpack.c.0.s8 %v1644
        %v1646 = vlaneseq
        %v1647 = vshrl.u32 %v1646, 7
        %v1648 = vsub.s32 %v1645, %v1647
        %v1649 = vrot.slane %v1641, %v1648
        %v1651 = vunpack.c.l.s4 1983009808
        %v1652 = vunpack.c.0.s8 %v1651
        %v1653 = vlaneseq
        %v1654 = vshrl.u32 %v1653, 7
        %v1655 = vsub.s32 %v1652, %v1654
        %v1656 = vrot.slane %v1642, %v1655
        %v1657 = vcombine.low %v1622, %v1630
        %v1658 = vcombine.high %v1622, %v1630
        %v1660 = vunpack.c.l.s4 1983009808
        %v1661 = vunpack.c.0.s8 %v1660
        %v1662 = vlaneseq
        %v1663 = vshrl.u32 %v1662, 7
        %v1664 = vsub.s32 %v1661, %v1663
        %v1665 = vrot.slane %v1657, %v1664
        %v1667 = vunpack.c.l.s4 1983009808
        %v1668 = vunpack.c.0.s8 %v1667
        %v1669 = vlaneseq
        %v1670 = vshrl.u32 %v1669, 7
        %v1671 = vsub.s32 %v1668, %v1670
        %v1672 = vrot.slane %v1658, %v1671
        %v1673 = vcombine.low %v1649, %v1665
        %v1674 = vcombine.high %v1649, %v1665
        %v1676 = vunpack.c.l.s4 1934713408
        %v1677 = vunpack.c.0.s8 %v1676
        %v1678 = vlaneseq
        %v1679 = vshrl.u32 %v1678, 7
        %v1680 = vsub.s32 %v1677, %v1679
        %v1681 = vrot.slane %v1673, %v1680
        %v1683 = vunpack.c.l.s4 1934713408
        %v1684 = vunpack.c.0.s8 %v1683
        %v1685 = vlaneseq
        %v1686 = vshrl.u32 %v1685, 7
        %v1687 = vsub.s32 %v1684, %v1686
        %v1688 = vrot.slane %v1674, %v1687
        %v1689 = vcombine.low %v1656, %v1672
        %v1690 = vcombine.high %v1656, %v1672
        %v1692 = vunpack.c.l.s4 1934713408
        %v1693 = vunpack.c.0.s8 %v1692
        %v1694 = vlaneseq
        %v1695 = vshrl.u32 %v1694, 7
        %v1696 = vsub.s32 %v1693, %v1695
        %v1697 = vrot.slane %v1689, %v1696
        %v1699 = vunpack.c.l.s4 1934713408
        %v1700 = vunpack.c.0.s8 %v1699
        %v1701 = vlaneseq
        %v1702 = vshrl.u32 %v1701, 7
        %v1703 = vsub.s32 %v1700, %v1702
        %v1704 = vrot.slane %v1690, %v1703
        %v1705 = vcombine.high %v1681, 0.0
        %v1706 = vcombine.high %v1688, 0.0
        %v1707 = vcombine.high %v1697, 0.0
        %v1708 = vcombine.high %v1704, 0.0
        %v1709 = vcombine.low %v1620, %v1628
        %v1711 = vunpack.c.l.s4 1983009808
        %v1712 = vunpack.c.0.s8 %v1711
        %v1713 = vlaneseq
        %v1714 = vshrl.u32 %v1713, 7
        %v1715 = vsub.s32 %v1712, %v1714
        %v1716 = vrot.slane %v1709, %v1715
        %v1717 = vcombine.low %v1624, %v1632
        %v1719 = vunpack.c.l.s4 1983009808
        %v1720 = vunpack.c.0.s8 %v1719
        %v1721 = vlaneseq
        %v1722 = vshrl.u32 %v1721, 7
        %v1723 = vsub.s32 %v1720, %v1722
        %v1724 = vrot.slane %v1717, %v1723
        %v1725 = vcombine.low %v1716, %v1724
        %v1727 = vunpack.c.l.s4 1934713408
        %v1728 = vunpack.c.0.s8 %v1727
        %v1729 = vlaneseq
        %v1730 = vshrl.u32 %v1729, 7
        %v1731 = vsub.s32 %v1728, %v1730
        %v1732 = vrot.slane %v1725, %v1731
        %v1733 = vcombine.high %v1732, 0.0
        %1735 = vrot.lane.b32.xlu0 %v1705, 16
        %v1736 = vpop.permute.xlu0 %1735
        %1739 = vrot.lane.b32.xlu0 %v1688, 32
        %v1740 = vpop.permute.xlu0 %1739
        %1743 = vrot.lane.b32.xlu0 %v1706, 48
        %v1744 = vpop.permute.xlu0 %1743
        %1747 = vrot.lane.b32.xlu0 %v1697, 64
        %v1748 = vpop.permute.xlu0 %1747
        %1751 = vrot.lane.b32.xlu0 %v1707, 80
        %v1752 = vpop.permute.xlu0 %1751
        %1755 = vrot.lane.b32.xlu0 %v1704, 96
        %v1756 = vpop.permute.xlu0 %1755
        %1759 = vrot.lane.b32.xlu0 %v1708, 112
        %v1760 = vpop.permute.xlu0 %1759
        %1763 = vrot.lane.b32.xlu0 %v1733, 16
        %v1764 = vpop.permute.xlu0 %1763
        %v1766 = vsel %vm658, %v1681, %v1736
        %v1767 = vsel %vm660, %v1766, %v1740
        %v1768 = vsel %vm662, %v1767, %v1744
        %v1769 = vsel %vm664, %v1768, %v1748
        %v1770 = vsel %vm666, %v1769, %v1752
        %v1771 = vsel %vm668, %v1770, %v1756
        %v1772 = vsel %vm670, %v1771, %v1760
        %v1773 = vsel %vm658, %v1732, %v1764
        %1774 = vrot.lane.b32.xlu0 %v1466, 126
        %v1775 = vpop.permute.xlu0 %1774
        %1776 = vrot.lane.b32.xlu0 %v1465, 126
        %v1777 = vpop.permute.xlu0 %1776
        %1778 = vrot.lane.b32.xlu0 %v1469, 126
        %v1779 = vpop.permute.xlu0 %1778
        %1780 = vrot.lane.b32.xlu0 %v1468, 126
        %v1781 = vpop.permute.xlu0 %1780
        %1782 = vrot.lane.b32.xlu0 %v1472, 126
        %v1783 = vpop.permute.xlu0 %1782
        %1784 = vrot.lane.b32.xlu0 %v1471, 126
        %v1785 = vpop.permute.xlu0 %1784
        %1786 = vrot.lane.b32.xlu0 %v1475, 126
        %v1787 = vpop.permute.xlu0 %1786
        %1788 = vrot.lane.b32.xlu0 %v1474, 126
        %v1789 = vpop.permute.xlu0 %1788
        %v1798 = vcombine.low %v1775, %v1783
        %v1799 = vcombine.high %v1775, %v1783
        %v1801 = vunpack.c.l.s4 1983009808
        %v1802 = vunpack.c.0.s8 %v1801
        %v1803 = vlaneseq
        %v1804 = vshrl.u32 %v1803, 7
        %v1805 = vsub.s32 %v1802, %v1804
        %v1806 = vrot.slane %v1798, %v1805
        %v1808 = vunpack.c.l.s4 1983009808
        %v1809 = vunpack.c.0.s8 %v1808
        %v1810 = vlaneseq
        %v1811 = vshrl.u32 %v1810, 7
        %v1812 = vsub.s32 %v1809, %v1811
        %v1813 = vrot.slane %v1799, %v1812
        %v1814 = vcombine.low %v1779, %v1787
        %v1815 = vcombine.high %v1779, %v1787
        %v1817 = vunpack.c.l.s4 1983009808
        %v1818 = vunpack.c.0.s8 %v1817
        %v1819 = vlaneseq
        %v1820 = vshrl.u32 %v1819, 7
        %v1821 = vsub.s32 %v1818, %v1820
        %v1822 = vrot.slane %v1814, %v1821
        %v1824 = vunpack.c.l.s4 1983009808
        %v1825 = vunpack.c.0.s8 %v1824
        %v1826 = vlaneseq
        %v1827 = vshrl.u32 %v1826, 7
        %v1828 = vsub.s32 %v1825, %v1827
        %v1829 = vrot.slane %v1815, %v1828
        %v1830 = vcombine.low %v1806, %v1822
        %v1831 = vcombine.high %v1806, %v1822
        %v1833 = vunpack.c.l.s4 1934713408
        %v1834 = vunpack.c.0.s8 %v1833
        %v1835 = vlaneseq
        %v1836 = vshrl.u32 %v1835, 7
        %v1837 = vsub.s32 %v1834, %v1836
        %v1838 = vrot.slane %v1830, %v1837
        %v1840 = vunpack.c.l.s4 1934713408
        %v1841 = vunpack.c.0.s8 %v1840
        %v1842 = vlaneseq
        %v1843 = vshrl.u32 %v1842, 7
        %v1844 = vsub.s32 %v1841, %v1843
        %v1845 = vrot.slane %v1831, %v1844
        %v1846 = vcombine.low %v1813, %v1829
        %v1847 = vcombine.high %v1813, %v1829
        %v1849 = vunpack.c.l.s4 1934713408
        %v1850 = vunpack.c.0.s8 %v1849
        %v1851 = vlaneseq
        %v1852 = vshrl.u32 %v1851, 7
        %v1853 = vsub.s32 %v1850, %v1852
        %v1854 = vrot.slane %v1846, %v1853
        %v1856 = vunpack.c.l.s4 1934713408
        %v1857 = vunpack.c.0.s8 %v1856
        %v1858 = vlaneseq
        %v1859 = vshrl.u32 %v1858, 7
        %v1860 = vsub.s32 %v1857, %v1859
        %v1861 = vrot.slane %v1847, %v1860
        %v1862 = vcombine.high %v1838, 0.0
        %v1863 = vcombine.high %v1845, 0.0
        %v1864 = vcombine.high %v1854, 0.0
        %v1865 = vcombine.high %v1861, 0.0
        %v1866 = vcombine.low %v1777, %v1785
        %v1868 = vunpack.c.l.s4 1983009808
        %v1869 = vunpack.c.0.s8 %v1868
        %v1870 = vlaneseq
        %v1871 = vshrl.u32 %v1870, 7
        %v1872 = vsub.s32 %v1869, %v1871
        %v1873 = vrot.slane %v1866, %v1872
        %v1874 = vcombine.low %v1781, %v1789
        %v1876 = vunpack.c.l.s4 1983009808
        %v1877 = vunpack.c.0.s8 %v1876
        %v1878 = vlaneseq
        %v1879 = vshrl.u32 %v1878, 7
        %v1880 = vsub.s32 %v1877, %v1879
        %v1881 = vrot.slane %v1874, %v1880
        %v1882 = vcombine.low %v1873, %v1881
        %v1884 = vunpack.c.l.s4 1934713408
        %v1885 = vunpack.c.0.s8 %v1884
        %v1886 = vlaneseq
        %v1887 = vshrl.u32 %v1886, 7
        %v1888 = vsub.s32 %v1885, %v1887
        %v1889 = vrot.slane %v1882, %v1888
        %v1890 = vcombine.high %v1889, 0.0
        %1892 = vrot.lane.b32.xlu0 %v1862, 16
        %v1893 = vpop.permute.xlu0 %1892
        %1896 = vrot.lane.b32.xlu0 %v1845, 32
        %v1897 = vpop.permute.xlu0 %1896
        %1900 = vrot.lane.b32.xlu0 %v1863, 48
        %v1901 = vpop.permute.xlu0 %1900
        %1904 = vrot.lane.b32.xlu0 %v1854, 64
        %v1905 = vpop.permute.xlu0 %1904
        %1908 = vrot.lane.b32.xlu0 %v1864, 80
        %v1909 = vpop.permute.xlu0 %1908
        %1912 = vrot.lane.b32.xlu0 %v1861, 96
        %v1913 = vpop.permute.xlu0 %1912
        %1916 = vrot.lane.b32.xlu0 %v1865, 112
        %v1917 = vpop.permute.xlu0 %1916
        %1920 = vrot.lane.b32.xlu0 %v1890, 16
        %v1921 = vpop.permute.xlu0 %1920
        %v1923 = vsel %vm658, %v1838, %v1893
        %v1924 = vsel %vm660, %v1923, %v1897
        %v1925 = vsel %vm662, %v1924, %v1901
        %v1926 = vsel %vm664, %v1925, %v1905
        %v1927 = vsel %vm666, %v1926, %v1909
        %v1928 = vsel %vm668, %v1927, %v1913
        %v1929 = vsel %vm670, %v1928, %v1917
        %v1930 = vsel %vm658, %v1889, %v1921
        %v1933 = vrot.slane %v836, 4
        %v1934 = vrot.slane %v837, 4
        %v1939 = vrot.slane %v1147, 4
        %v1940 = vrot.slane %v1148, 4
        %v1945 = vrot.slane %v1461, 4
        %v1946 = vrot.slane %v1462, 4
        %v1951 = vrot.slane %v1772, 4
        %v1952 = vrot.slane %v1773, 4
        %vm1955 = vcmask 1043456
        %v1956 = vsel %vm1955, %v671, %v1933
        %v1957 = vsel %vm1955, %v672, %v1934
        %v1958 = vsel %vm1955, %v993, %v1939
        %v1959 = vsel %vm1955, %v994, %v1940
        %v1960 = vsel %vm1955, %v1304, %v1945
        %v1961 = vsel %vm1955, %v1305, %v1946
        %v1962 = vsel %vm1955, %v1615, %v1951
        %v1963 = vsel %vm1955, %v1616, %v1952
        %v1964 = vld [vmem:[%s3] sm:$0x3]
        %v1965 = vpack.c.bf16 %v1958, %v1956
        %v1966 = vpack.c.bf16 %v1959, %v1957
        %v1967 = vpack.c.bf16 %v1962, %v1960
        %v1968 = vpack.c.bf16 %v1963, %v1961
        %v1969 = vpack.c.bf16 %v1929, %v1929
        %v1970 = vpack.c.bf16 %v1930, %v1930
        %v1971 = vld [vmem:[%s4] sm:$0xf]
        %1973 = vset.pattern.permute.xlu0 0
        %1974 = vperm.xlu0 %1973, %v1971
        %v1975 = vpop.permute.xlu0 %1974
        %vm1977 = vcmask 293888
        %v1979 = vsel %vm1977, %v1964, 0
        %v1982 = vsel %vm474, %v1969, 0
        %v1985 = vsel %vm474, %v1970, 0
        %1987 = vmatprep.subr.bf16.mxu0 %v1966
        %1988 = vmatpush1.bf16.msra.mxu0 %v1965
        %1989 = vmatprep.subr.bf16.mxu0 %v1968
        %1990 = vmatpush1.bf16.msra.mxu0 %v1967
        %1991 = vmatprep.subr.bf16.mxu0 %v1985
        %1992 = vmatpush1.bf16.msra.mxu0 %v1982
        %1993 = vmatprep.subr.bf16.mxu0 0
        %1994 = vmatpush1.bf16.msra.mxu0 0
        %1995 = vmatprep.subr.bf16.mxu0 0
        %1996 = vmatpush1.bf16.msra.mxu0 0
        %1997 = vmatprep.subr.bf16.mxu0 0
        %1998 = vmatpush1.bf16.msra.mxu0 0
        %1999 = vmatprep.subr.bf16.mxu0 0
        %2000 = vmatpush1.bf16.msra.mxu0 0
        %2001 = vmatprep.subr.bf16.mxu0 0
        %2002 = vmatpush1.bf16.msra.mxu0 0
        %2003 = vmatprep.subr.bf16.mxu0 0
        %2004 = vmatpush1.bf16.msra.mxu0 0
        %2005 = vmatprep.subr.bf16.mxu0 0
        %2006 = vmatpush1.bf16.msra.mxu0 0
        %2007 = vmatprep.subr.bf16.mxu0 0
        %2008 = vmatpush1.bf16.msra.mxu0 0
        %2009 = vmatprep.subr.bf16.mxu0 0
        %2010 = vmatpush1.bf16.msra.mxu0 0
        %2011 = vmatprep.subr.bf16.mxu0 0
        %2012 = vmatpush1.bf16.msra.mxu0 0
        %2013 = vmatprep.subr.bf16.mxu0 0
        %2014 = vmatpush1.bf16.msra.mxu0 0
        %2015 = vmatprep.subr.bf16.mxu0 0
        %2016 = vmatpush1.bf16.msra.mxu0 0
        %2017 = vmatprep.subr.bf16.mxu0 0
        %2018 = vmatpush1.bf16.msra.mxu0 0
        %2019 = vmatprep.mubr.bf16.mxu0 0
        %2020 = vmatmul.mubr.bf16.gmra.mrb[0].mxu0 %v1979
        %v2021 = vpop.f32.mrb[0].mxu0
        %v2022 = vadd.f32 %v1975, %v2021
        %v2023 = vpop.f32.mrb[0].mxu0
        %v2024 = vadd.f32 %v1975, %v2023
        %v2025 = vpop.f32.mrb[0].mxu0
        %v2026 = vpop.f32.mrb[0].mxu0
        %2027 = vdwg.mxu0
        %vm2028 = vcmp.gt.f32.partialorder %v2022, 0.0
        %vm2029 = vcmp.gt.f32.partialorder %v2024, 0.0
        %v2030 = vmul.f32 %v2022, 0.2
        %v2031 = vmul.f32 %v2024, 0.2
        %v2032 = vsel %vm2028, %v2022, %v2030
        %v2033 = vsel %vm2029, %v2024, %v2031
        %2035 = vrot.lane.b32.xlu0 %v2032, 112
        %v2036 = vpop.permute.xlu0 %2035
        %2038 = vrot.lane.b32.xlu0 %v2032, 96
        %v2039 = vpop.permute.xlu0 %2038
        %2041 = vrot.lane.b32.xlu0 %v2032, 80
        %v2042 = vpop.permute.xlu0 %2041
        %2044 = vrot.lane.b32.xlu0 %v2032, 64
        %v2045 = vpop.permute.xlu0 %2044
        %2047 = vrot.lane.b32.xlu0 %v2032, 48
        %v2048 = vpop.permute.xlu0 %2047
        %2050 = vrot.lane.b32.xlu0 %v2032, 32
        %v2051 = vpop.permute.xlu0 %2050
        %2053 = vrot.lane.b32.xlu0 %v2032, 16
        %v2054 = vpop.permute.xlu0 %2053
        %2057 = vrot.lane.b32.xlu0 %v2033, 112
        %v2058 = vpop.permute.xlu0 %2057
        %v2059 = vcombine.low %v2032, %v2039
        %v2061 = vunpack.c.l.s4 1983009808
        %v2062 = vunpack.c.0.s8 %v2061
        %v2063 = vlaneseq
        %v2064 = vshrl.u32 %v2063, 7
        %v2065 = vsub.s32 %v2062, %v2064
        %v2066 = vrot.slane %v2059, %v2065
        %v2067 = vcombine.low %v2036, %v2042
        %v2069 = vunpack.c.l.s4 1983009808
        %v2070 = vunpack.c.0.s8 %v2069
        %v2071 = vlaneseq
        %v2072 = vshrl.u32 %v2071, 7
        %v2073 = vsub.s32 %v2070, %v2072
        %v2074 = vrot.slane %v2067, %v2073
        %v2075 = vcombine.low %v2045, %v2051
        %v2077 = vunpack.c.l.s4 1983009808
        %v2078 = vunpack.c.0.s8 %v2077
        %v2079 = vlaneseq
        %v2080 = vshrl.u32 %v2079, 7
        %v2081 = vsub.s32 %v2078, %v2080
        %v2082 = vrot.slane %v2075, %v2081
        %v2083 = vcombine.low %v2048, %v2054
        %v2085 = vunpack.c.l.s4 1983009808
        %v2086 = vunpack.c.0.s8 %v2085
        %v2087 = vlaneseq
        %v2088 = vshrl.u32 %v2087, 7
        %v2089 = vsub.s32 %v2086, %v2088
        %v2090 = vrot.slane %v2083, %v2089
        %v2091 = vcombine.low %v2066, %v2074
        %v2092 = vcombine.high %v2066, %v2074
        %v2094 = vunpack.c.l.s4 1934713408
        %v2095 = vunpack.c.0.s8 %v2094
        %v2096 = vlaneseq
        %v2097 = vshrl.u32 %v2096, 7
        %v2098 = vsub.s32 %v2095, %v2097
        %v2099 = vrot.slane %v2091, %v2098
        %v2101 = vunpack.c.l.s4 1934713408
        %v2102 = vunpack.c.0.s8 %v2101
        %v2103 = vlaneseq
        %v2104 = vshrl.u32 %v2103, 7
        %v2105 = vsub.s32 %v2102, %v2104
        %v2106 = vrot.slane %v2092, %v2105
        %v2107 = vcombine.low %v2082, %v2090
        %v2108 = vcombine.high %v2082, %v2090
        %v2110 = vunpack.c.l.s4 1934713408
        %v2111 = vunpack.c.0.s8 %v2110
        %v2112 = vlaneseq
        %v2113 = vshrl.u32 %v2112, 7
        %v2114 = vsub.s32 %v2111, %v2113
        %v2115 = vrot.slane %v2107, %v2114
        %v2117 = vunpack.c.l.s4 1934713408
        %v2118 = vunpack.c.0.s8 %v2117
        %v2119 = vlaneseq
        %v2120 = vshrl.u32 %v2119, 7
        %v2121 = vsub.s32 %v2118, %v2120
        %v2122 = vrot.slane %v2108, %v2121
        %v2123 = vcombine.low %v2099, %v2115
        %v2124 = vcombine.high %v2099, %v2115
        %v2125 = vcombine.low %v2106, %v2122
        %v2126 = vcombine.high %v2106, %v2122
        %v2128 = vunpack.c.l.s4 1983009808
        %v2129 = vunpack.c.0.s8 %v2128
        %v2130 = vlaneseq
        %v2131 = vshrl.u32 %v2130, 7
        %v2132 = vsub.s32 %v2129, %v2131
        %v2133 = vrot.slane %v2033, %v2132
        %v2136 = vunpack.c.l.s4 1983009808
        %v2137 = vunpack.c.0.s8 %v2136
        %v2138 = vlaneseq
        %v2139 = vshrl.u32 %v2138, 7
        %v2140 = vsub.s32 %v2137, %v2139
        %v2141 = vrot.slane %v2058, %v2140
        %v2142 = vcombine.low %v2133, %v2141
        %v2143 = vcombine.high %v2133, %v2141
        %v2145 = vunpack.c.l.s4 1934713408
        %v2146 = vunpack.c.0.s8 %v2145
        %v2147 = vlaneseq
        %v2148 = vshrl.u32 %v2147, 7
        %v2149 = vsub.s32 %v2146, %v2148
        %v2150 = vrot.slane %v2142, %v2149
        %v2152 = vunpack.c.l.s4 1934713408
        %v2153 = vunpack.c.0.s8 %v2152
        %v2154 = vlaneseq
        %v2155 = vshrl.u32 %v2154, 7
        %v2156 = vsub.s32 %v2153, %v2155
        %v2157 = vrot.slane %v2143, %v2156
        %v2158 = vcombine.high %v2150, 0.0
        %v2159 = vcombine.high %v2157, 0.0
        %v2160 = vlaneseq
        %v2161 = vshrl.u32 %v2160, 7
        %v2162 = vadd.s32 %v2161, 8
        %vm2163 = vcmp.eq.s32.totalorder %v2161, 0
        %vm2164 = vcmp.eq.s32.totalorder %v2162, 0
        %p2165 = scmp.eq.s32.totalorder %s32, 0
        %s2166 = scalar_select %p2165, 1, 0
        %v2167 = vstv %s2166
        %vm2168 = vcmp.eq.s32.totalorder %v2167, 1
        %vm2169 = vmand %vm2163, %vm2168
        %vm2170 = vmand %vm2164, %vm2168
        %v2171 = vsel %vm2169, 0.0, %v2123
        %v2172 = vsel %vm2170, 0.0, %v2150
        %v2173 = vsel %vm2169, 0.0, %v2124
        %v2174 = vsel %vm2170, 0.0, %v2158
        %v2175 = vsel %vm2169, 0.0, %v2125
        %v2176 = vsel %vm2170, 0.0, %v2157
        %v2177 = vsel %vm2169, 0.0, %v2126
        %v2178 = vsel %vm2170, 0.0, %v2159
        %vm2179 = vcmp.eq.s32.totalorder %v2161, 9
        %vm2180 = vcmp.eq.s32.totalorder %v2162, 9
        %p2181 = scmp.eq.s32.totalorder %s32, 1
        %s2182 = scalar_select %p2181, 1, 0
        %v2183 = vstv %s2182
        %vm2184 = vcmp.eq.s32.totalorder %v2183, 1
        %vm2185 = vmand %vm2179, %vm2184
        %vm2186 = vmand %vm2180, %vm2184
        %v2187 = vsel %vm2185, 0.0, %v2171
        %v2188 = vsel %vm2186, 0.0, %v2172
        %v2189 = vsel %vm2185, 0.0, %v2173
        %v2190 = vsel %vm2186, 0.0, %v2174
        %v2191 = vsel %vm2185, 0.0, %v2175
        %v2192 = vsel %vm2186, 0.0, %v2176
        %v2193 = vsel %vm2185, 0.0, %v2177
        %v2194 = vsel %vm2186, 0.0, %v2178
        %2203 = vrot.lane.b32.xlu0 %v2187, 1
        %v2204 = vpop.permute.xlu0 %2203
        %2205 = vrot.lane.b32.xlu0 %v2188, 1
        %v2206 = vpop.permute.xlu0 %2205
        %2207 = vrot.lane.b32.xlu0 %v2189, 1
        %v2208 = vpop.permute.xlu0 %2207
        %2209 = vrot.lane.b32.xlu0 %v2190, 1
        %v2210 = vpop.permute.xlu0 %2209
        %2211 = vrot.lane.b32.xlu0 %v2191, 1
        %v2212 = vpop.permute.xlu0 %2211
        %2213 = vrot.lane.b32.xlu0 %v2192, 1
        %v2214 = vpop.permute.xlu0 %2213
        %2215 = vrot.lane.b32.xlu0 %v2193, 1
        %v2216 = vpop.permute.xlu0 %2215
        %2217 = vrot.lane.b32.xlu0 %v2194, 1
        %v2218 = vpop.permute.xlu0 %2217
        %v2227 = vsel %vm515, 0.0, %v2204
        %v2228 = vsel %vm515, 0.0, %v2206
        %v2229 = vsel %vm515, 0.0, %v2208
        %v2230 = vsel %vm515, 0.0, %v2210
        %v2231 = vsel %vm515, 0.0, %v2212
        %v2232 = vsel %vm515, 0.0, %v2214
        %v2233 = vsel %vm515, 0.0, %v2216
        %v2234 = vsel %vm515, 0.0, %v2218
        %v2235 = vsel %vm524, %v2227, 0.0
        %v2236 = vsel %vm524, %v2228, 0.0
        %v2237 = vsel %vm524, %v2229, 0.0
        %v2238 = vsel %vm524, %v2230, 0.0
        %v2239 = vsel %vm524, %v2231, 0.0
        %v2240 = vsel %vm524, %v2232, 0.0
        %v2241 = vsel %vm524, %v2233, 0.0
        %v2242 = vsel %vm524, %v2234, 0.0
        %v2243 = vcombine.low %v2235, %v2239
        %v2244 = vcombine.high %v2235, %v2239
        %v2246 = vunpack.c.l.s4 1983009808
        %v2247 = vunpack.c.0.s8 %v2246
        %v2248 = vlaneseq
        %v2249 = vshrl.u32 %v2248, 7
        %v2250 = vsub.s32 %v2247, %v2249
        %v2251 = vrot.slane %v2243, %v2250
        %v2253 = vunpack.c.l.s4 1983009808
        %v2254 = vunpack.c.0.s8 %v2253
        %v2255 = vlaneseq
        %v2256 = vshrl.u32 %v2255, 7
        %v2257 = vsub.s32 %v2254, %v2256
        %v2258 = vrot.slane %v2244, %v2257
        %v2259 = vcombine.low %v2237, %v2241
        %v2260 = vcombine.high %v2237, %v2241
        %v2262 = vunpack.c.l.s4 1983009808
        %v2263 = vunpack.c.0.s8 %v2262
        %v2264 = vlaneseq
        %v2265 = vshrl.u32 %v2264, 7
        %v2266 = vsub.s32 %v2263, %v2265
        %v2267 = vrot.slane %v2259, %v2266
        %v2269 = vunpack.c.l.s4 1983009808
        %v2270 = vunpack.c.0.s8 %v2269
        %v2271 = vlaneseq
        %v2272 = vshrl.u32 %v2271, 7
        %v2273 = vsub.s32 %v2270, %v2272
        %v2274 = vrot.slane %v2260, %v2273
        %v2275 = vcombine.low %v2251, %v2267
        %v2276 = vcombine.high %v2251, %v2267
        %v2278 = vunpack.c.l.s4 1934713408
        %v2279 = vunpack.c.0.s8 %v2278
        %v2280 = vlaneseq
        %v2281 = vshrl.u32 %v2280, 7
        %v2282 = vsub.s32 %v2279, %v2281
        %v2283 = vrot.slane %v2275, %v2282
        %v2285 = vunpack.c.l.s4 1934713408
        %v2286 = vunpack.c.0.s8 %v2285
        %v2287 = vlaneseq
        %v2288 = vshrl.u32 %v2287, 7
        %v2289 = vsub.s32 %v2286, %v2288
        %v2290 = vrot.slane %v2276, %v2289
        %v2291 = vcombine.low %v2258, %v2274
        %v2292 = vcombine.high %v2258, %v2274
        %v2294 = vunpack.c.l.s4 1934713408
        %v2295 = vunpack.c.0.s8 %v2294
        %v2296 = vlaneseq
        %v2297 = vshrl.u32 %v2296, 7
        %v2298 = vsub.s32 %v2295, %v2297
        %v2299 = vrot.slane %v2291, %v2298
        %v2301 = vunpack.c.l.s4 1934713408
        %v2302 = vunpack.c.0.s8 %v2301
        %v2303 = vlaneseq
        %v2304 = vshrl.u32 %v2303, 7
        %v2305 = vsub.s32 %v2302, %v2304
        %v2306 = vrot.slane %v2292, %v2305
        %v2307 = vcombine.high %v2283, 0.0
        %v2308 = vcombine.high %v2290, 0.0
        %v2309 = vcombine.high %v2299, 0.0
        %v2310 = vcombine.high %v2306, 0.0
        %2312 = vrot.lane.b32.xlu0 %v2307, 16
        %v2313 = vpop.permute.xlu0 %2312
        %2316 = vrot.lane.b32.xlu0 %v2290, 32
        %v2317 = vpop.permute.xlu0 %2316
        %2320 = vrot.lane.b32.xlu0 %v2308, 48
        %v2321 = vpop.permute.xlu0 %2320
        %2324 = vrot.lane.b32.xlu0 %v2299, 64
        %v2325 = vpop.permute.xlu0 %2324
        %2328 = vrot.lane.b32.xlu0 %v2309, 80
        %v2329 = vpop.permute.xlu0 %2328
        %2332 = vrot.lane.b32.xlu0 %v2306, 96
        %v2333 = vpop.permute.xlu0 %2332
        %2336 = vrot.lane.b32.xlu0 %v2310, 112
        %v2337 = vpop.permute.xlu0 %2336
        %v2339 = vsel %vm658, %v2283, %v2313
        %v2340 = vsel %vm660, %v2339, %v2317
        %v2341 = vsel %vm662, %v2340, %v2321
        %v2342 = vsel %vm664, %v2341, %v2325
        %v2343 = vsel %vm666, %v2342, %v2329
        %v2344 = vsel %vm668, %v2343, %v2333
        %v2345 = vsel %vm670, %v2344, %v2337
        %2350 = vrot.lane.b32.xlu0 %v2235, 127
        %v2351 = vpop.permute.xlu0 %2350
        %2352 = vrot.lane.b32.xlu0 %v2237, 127
        %v2353 = vpop.permute.xlu0 %2352
        %2354 = vrot.lane.b32.xlu0 %v2239, 127
        %v2355 = vpop.permute.xlu0 %2354
        %2356 = vrot.lane.b32.xlu0 %v2241, 127
        %v2357 = vpop.permute.xlu0 %2356
        %v2362 = vcombine.low %v2351, %v2355
        %v2363 = vcombine.high %v2351, %v2355
        %v2365 = vunpack.c.l.s4 1983009808
        %v2366 = vunpack.c.0.s8 %v2365
        %v2367 = vlaneseq
        %v2368 = vshrl.u32 %v2367, 7
        %v2369 = vsub.s32 %v2366, %v2368
        %v2370 = vrot.slane %v2362, %v2369
        %v2372 = vunpack.c.l.s4 1983009808
        %v2373 = vunpack.c.0.s8 %v2372
        %v2374 = vlaneseq
        %v2375 = vshrl.u32 %v2374, 7
        %v2376 = vsub.s32 %v2373, %v2375
        %v2377 = vrot.slane %v2363, %v2376
        %v2378 = vcombine.low %v2353, %v2357
        %v2379 = vcombine.high %v2353, %v2357
        %v2381 = vunpack.c.l.s4 1983009808
        %v2382 = vunpack.c.0.s8 %v2381
        %v2383 = vlaneseq
        %v2384 = vshrl.u32 %v2383, 7
        %v2385 = vsub.s32 %v2382, %v2384
        %v2386 = vrot.slane %v2378, %v2385
        %v2388 = vunpack.c.l.s4 1983009808
        %v2389 = vunpack.c.0.s8 %v2388
        %v2390 = vlaneseq
        %v2391 = vshrl.u32 %v2390, 7
        %v2392 = vsub.s32 %v2389, %v2391
        %v2393 = vrot.slane %v2379, %v2392
        %v2394 = vcombine.low %v2370, %v2386
        %v2395 = vcombine.high %v2370, %v2386
        %v2397 = vunpack.c.l.s4 1934713408
        %v2398 = vunpack.c.0.s8 %v2397
        %v2399 = vlaneseq
        %v2400 = vshrl.u32 %v2399, 7
        %v2401 = vsub.s32 %v2398, %v2400
        %v2402 = vrot.slane %v2394, %v2401
        %v2404 = vunpack.c.l.s4 1934713408
        %v2405 = vunpack.c.0.s8 %v2404
        %v2406 = vlaneseq
        %v2407 = vshrl.u32 %v2406, 7
        %v2408 = vsub.s32 %v2405, %v2407
        %v2409 = vrot.slane %v2395, %v2408
        %v2410 = vcombine.low %v2377, %v2393
        %v2411 = vcombine.high %v2377, %v2393
        %v2413 = vunpack.c.l.s4 1934713408
        %v2414 = vunpack.c.0.s8 %v2413
        %v2415 = vlaneseq
        %v2416 = vshrl.u32 %v2415, 7
        %v2417 = vsub.s32 %v2414, %v2416
        %v2418 = vrot.slane %v2410, %v2417
        %v2420 = vunpack.c.l.s4 1934713408
        %v2421 = vunpack.c.0.s8 %v2420
        %v2422 = vlaneseq
        %v2423 = vshrl.u32 %v2422, 7
        %v2424 = vsub.s32 %v2421, %v2423
        %v2425 = vrot.slane %v2411, %v2424
        %v2426 = vcombine.high %v2402, 0.0
        %v2427 = vcombine.high %v2409, 0.0
        %v2428 = vcombine.high %v2418, 0.0
        %v2429 = vcombine.high %v2425, 0.0
        %2431 = vrot.lane.b32.xlu0 %v2426, 16
        %v2432 = vpop.permute.xlu0 %2431
        %2435 = vrot.lane.b32.xlu0 %v2409, 32
        %v2436 = vpop.permute.xlu0 %2435
        %2439 = vrot.lane.b32.xlu0 %v2427, 48
        %v2440 = vpop.permute.xlu0 %2439
        %2443 = vrot.lane.b32.xlu0 %v2418, 64
        %v2444 = vpop.permute.xlu0 %2443
        %2447 = vrot.lane.b32.xlu0 %v2428, 80
        %v2448 = vpop.permute.xlu0 %2447
        %2451 = vrot.lane.b32.xlu0 %v2425, 96
        %v2452 = vpop.permute.xlu0 %2451
        %2455 = vrot.lane.b32.xlu0 %v2429, 112
        %v2456 = vpop.permute.xlu0 %2455
        %v2458 = vsel %vm658, %v2402, %v2432
        %v2459 = vsel %vm660, %v2458, %v2436
        %v2460 = vsel %vm662, %v2459, %v2440
        %v2461 = vsel %vm664, %v2460, %v2444
        %v2462 = vsel %vm666, %v2461, %v2448
        %v2463 = vsel %vm668, %v2462, %v2452
        %v2464 = vsel %vm670, %v2463, %v2456
        %2465 = vrot.lane.b32.xlu0 %v2235, 126
        %v2466 = vpop.permute.xlu0 %2465
        %2467 = vrot.lane.b32.xlu0 %v2237, 126
        %v2468 = vpop.permute.xlu0 %2467
        %2469 = vrot.lane.b32.xlu0 %v2239, 126
        %v2470 = vpop.permute.xlu0 %2469
        %2471 = vrot.lane.b32.xlu0 %v2241, 126
        %v2472 = vpop.permute.xlu0 %2471
        %v2477 = vcombine.low %v2466, %v2470
        %v2478 = vcombine.high %v2466, %v2470
        %v2480 = vunpack.c.l.s4 1983009808
        %v2481 = vunpack.c.0.s8 %v2480
        %v2482 = vlaneseq
        %v2483 = vshrl.u32 %v2482, 7
        %v2484 = vsub.s32 %v2481, %v2483
        %v2485 = vrot.slane %v2477, %v2484
        %v2487 = vunpack.c.l.s4 1983009808
        %v2488 = vunpack.c.0.s8 %v2487
        %v2489 = vlaneseq
        %v2490 = vshrl.u32 %v2489, 7
        %v2491 = vsub.s32 %v2488, %v2490
        %v2492 = vrot.slane %v2478, %v2491
        %v2493 = vcombine.low %v2468, %v2472
        %v2494 = vcombine.high %v2468, %v2472
        %v2496 = vunpack.c.l.s4 1983009808
        %v2497 = vunpack.c.0.s8 %v2496
        %v2498 = vlaneseq
        %v2499 = vshrl.u32 %v2498, 7
        %v2500 = vsub.s32 %v2497, %v2499
        %v2501 = vrot.slane %v2493, %v2500
        %v2503 = vunpack.c.l.s4 1983009808
        %v2504 = vunpack.c.0.s8 %v2503
        %v2505 = vlaneseq
        %v2506 = vshrl.u32 %v2505, 7
        %v2507 = vsub.s32 %v2504, %v2506
        %v2508 = vrot.slane %v2494, %v2507
        %v2509 = vcombine.low %v2485, %v2501
        %v2510 = vcombine.high %v2485, %v2501
        %v2512 = vunpack.c.l.s4 1934713408
        %v2513 = vunpack.c.0.s8 %v2512
        %v2514 = vlaneseq
        %v2515 = vshrl.u32 %v2514, 7
        %v2516 = vsub.s32 %v2513, %v2515
        %v2517 = vrot.slane %v2509, %v2516
        %v2519 = vunpack.c.l.s4 1934713408
        %v2520 = vunpack.c.0.s8 %v2519
        %v2521 = vlaneseq
        %v2522 = vshrl.u32 %v2521, 7
        %v2523 = vsub.s32 %v2520, %v2522
        %v2524 = vrot.slane %v2510, %v2523
        %v2525 = vcombine.low %v2492, %v2508
        %v2526 = vcombine.high %v2492, %v2508
        %v2528 = vunpack.c.l.s4 1934713408
        %v2529 = vunpack.c.0.s8 %v2528
        %v2530 = vlaneseq
        %v2531 = vshrl.u32 %v2530, 7
        %v2532 = vsub.s32 %v2529, %v2531
        %v2533 = vrot.slane %v2525, %v2532
        %v2535 = vunpack.c.l.s4 1934713408
        %v2536 = vunpack.c.0.s8 %v2535
        %v2537 = vlaneseq
        %v2538 = vshrl.u32 %v2537, 7
        %v2539 = vsub.s32 %v2536, %v2538
        %v2540 = vrot.slane %v2526, %v2539
        %v2541 = vcombine.high %v2517, 0.0
        %v2542 = vcombine.high %v2524, 0.0
        %v2543 = vcombine.high %v2533, 0.0
        %v2544 = vcombine.high %v2540, 0.0
        %2546 = vrot.lane.b32.xlu0 %v2541, 16
        %v2547 = vpop.permute.xlu0 %2546
        %2550 = vrot.lane.b32.xlu0 %v2524, 32
        %v2551 = vpop.permute.xlu0 %2550
        %2554 = vrot.lane.b32.xlu0 %v2542, 48
        %v2555 = vpop.permute.xlu0 %2554
        %2558 = vrot.lane.b32.xlu0 %v2533, 64
        %v2559 = vpop.permute.xlu0 %2558
        %2562 = vrot.lane.b32.xlu0 %v2543, 80
        %v2563 = vpop.permute.xlu0 %2562
        %2566 = vrot.lane.b32.xlu0 %v2540, 96
        %v2567 = vpop.permute.xlu0 %2566
        %2570 = vrot.lane.b32.xlu0 %v2544, 112
        %v2571 = vpop.permute.xlu0 %2570
        %v2573 = vsel %vm658, %v2517, %v2547
        %v2574 = vsel %vm660, %v2573, %v2551
        %v2575 = vsel %vm662, %v2574, %v2555
        %v2576 = vsel %vm664, %v2575, %v2559
        %v2577 = vsel %vm666, %v2576, %v2563
        %v2578 = vsel %vm668, %v2577, %v2567
        %v2579 = vsel %vm670, %v2578, %v2571
        %v2584 = vrot.slane %v2235, 1
        %v2585 = vrot.slane %v2236, 1
        %v2586 = vsel %vm995, %v2584, %v2585
        %v2587 = vrot.slane %v2237, 1
        %v2588 = vrot.slane %v2238, 1
        %v2589 = vsel %vm995, %v2587, %v2588
        %v2590 = vrot.slane %v2239, 1
        %v2591 = vrot.slane %v2240, 1
        %v2592 = vsel %vm995, %v2590, %v2591
        %v2593 = vrot.slane %v2241, 1
        %v2594 = vrot.slane %v2242, 1
        %v2595 = vsel %vm995, %v2593, %v2594
        %v2600 = vcombine.low %v2586, %v2592
        %v2601 = vcombine.high %v2586, %v2592
        %v2603 = vunpack.c.l.s4 1983009808
        %v2604 = vunpack.c.0.s8 %v2603
        %v2605 = vlaneseq
        %v2606 = vshrl.u32 %v2605, 7
        %v2607 = vsub.s32 %v2604, %v2606
        %v2608 = vrot.slane %v2600, %v2607
        %v2610 = vunpack.c.l.s4 1983009808
        %v2611 = vunpack.c.0.s8 %v2610
        %v2612 = vlaneseq
        %v2613 = vshrl.u32 %v2612, 7
        %v2614 = vsub.s32 %v2611, %v2613
        %v2615 = vrot.slane %v2601, %v2614
        %v2616 = vcombine.low %v2589, %v2595
        %v2617 = vcombine.high %v2589, %v2595
        %v2619 = vunpack.c.l.s4 1983009808
        %v2620 = vunpack.c.0.s8 %v2619
        %v2621 = vlaneseq
        %v2622 = vshrl.u32 %v2621, 7
        %v2623 = vsub.s32 %v2620, %v2622
        %v2624 = vrot.slane %v2616, %v2623
        %v2626 = vunpack.c.l.s4 1983009808
        %v2627 = vunpack.c.0.s8 %v2626
        %v2628 = vlaneseq
        %v2629 = vshrl.u32 %v2628, 7
        %v2630 = vsub.s32 %v2627, %v2629
        %v2631 = vrot.slane %v2617, %v2630
        %v2632 = vcombine.low %v2608, %v2624
        %v2633 = vcombine.high %v2608, %v2624
        %v2635 = vunpack.c.l.s4 1934713408
        %v2636 = vunpack.c.0.s8 %v2635
        %v2637 = vlaneseq
        %v2638 = vshrl.u32 %v2637, 7
        %v2639 = vsub.s32 %v2636, %v2638
        %v2640 = vrot.slane %v2632, %v2639
        %v2642 = vunpack.c.l.s4 1934713408
        %v2643 = vunpack.c.0.s8 %v2642
        %v2644 = vlaneseq
        %v2645 = vshrl.u32 %v2644, 7
        %v2646 = vsub.s32 %v2643, %v2645
        %v2647 = vrot.slane %v2633, %v2646
        %v2648 = vcombine.low %v2615, %v2631
        %v2649 = vcombine.high %v2615, %v2631
        %v2651 = vunpack.c.l.s4 1934713408
        %v2652 = vunpack.c.0.s8 %v2651
        %v2653 = vlaneseq
        %v2654 = vshrl.u32 %v2653, 7
        %v2655 = vsub.s32 %v2652, %v2654
        %v2656 = vrot.slane %v2648, %v2655
        %v2658 = vunpack.c.l.s4 1934713408
        %v2659 = vunpack.c.0.s8 %v2658
        %v2660 = vlaneseq
        %v2661 = vshrl.u32 %v2660, 7
        %v2662 = vsub.s32 %v2659, %v2661
        %v2663 = vrot.slane %v2649, %v2662
        %v2664 = vcombine.high %v2640, 0.0
        %v2665 = vcombine.high %v2647, 0.0
        %v2666 = vcombine.high %v2656, 0.0
        %v2667 = vcombine.high %v2663, 0.0
        %2669 = vrot.lane.b32.xlu0 %v2664, 16
        %v2670 = vpop.permute.xlu0 %2669
        %2673 = vrot.lane.b32.xlu0 %v2647, 32
        %v2674 = vpop.permute.xlu0 %2673
        %2677 = vrot.lane.b32.xlu0 %v2665, 48
        %v2678 = vpop.permute.xlu0 %2677
        %2681 = vrot.lane.b32.xlu0 %v2656, 64
        %v2682 = vpop.permute.xlu0 %2681
        %2685 = vrot.lane.b32.xlu0 %v2666, 80
        %v2686 = vpop.permute.xlu0 %2685
        %2689 = vrot.lane.b32.xlu0 %v2663, 96
        %v2690 = vpop.permute.xlu0 %2689
        %2693 = vrot.lane.b32.xlu0 %v2667, 112
        %v2694 = vpop.permute.xlu0 %2693
        %v2696 = vsel %vm658, %v2640, %v2670
        %v2697 = vsel %vm660, %v2696, %v2674
        %v2698 = vsel %vm662, %v2697, %v2678
        %v2699 = vsel %vm664, %v2698, %v2682
        %v2700 = vsel %vm666, %v2699, %v2686
        %v2701 = vsel %vm668, %v2700, %v2690
        %v2702 = vsel %vm670, %v2701, %v2694
        %2703 = vrot.lane.b32.xlu0 %v2586, 127
        %v2704 = vpop.permute.xlu0 %2703
        %2705 = vrot.lane.b32.xlu0 %v2589, 127
        %v2706 = vpop.permute.xlu0 %2705
        %2707 = vrot.lane.b32.xlu0 %v2592, 127
        %v2708 = vpop.permute.xlu0 %2707
        %2709 = vrot.lane.b32.xlu0 %v2595, 127
        %v2710 = vpop.permute.xlu0 %2709
        %v2715 = vcombine.low %v2704, %v2708
        %v2716 = vcombine.high %v2704, %v2708
        %v2718 = vunpack.c.l.s4 1983009808
        %v2719 = vunpack.c.0.s8 %v2718
        %v2720 = vlaneseq
        %v2721 = vshrl.u32 %v2720, 7
        %v2722 = vsub.s32 %v2719, %v2721
        %v2723 = vrot.slane %v2715, %v2722
        %v2725 = vunpack.c.l.s4 1983009808
        %v2726 = vunpack.c.0.s8 %v2725
        %v2727 = vlaneseq
        %v2728 = vshrl.u32 %v2727, 7
        %v2729 = vsub.s32 %v2726, %v2728
        %v2730 = vrot.slane %v2716, %v2729
        %v2731 = vcombine.low %v2706, %v2710
        %v2732 = vcombine.high %v2706, %v2710
        %v2734 = vunpack.c.l.s4 1983009808
        %v2735 = vunpack.c.0.s8 %v2734
        %v2736 = vlaneseq
        %v2737 = vshrl.u32 %v2736, 7
        %v2738 = vsub.s32 %v2735, %v2737
        %v2739 = vrot.slane %v2731, %v2738
        %v2741 = vunpack.c.l.s4 1983009808
        %v2742 = vunpack.c.0.s8 %v2741
        %v2743 = vlaneseq
        %v2744 = vshrl.u32 %v2743, 7
        %v2745 = vsub.s32 %v2742, %v2744
        %v2746 = vrot.slane %v2732, %v2745
        %v2747 = vcombine.low %v2723, %v2739
        %v2748 = vcombine.high %v2723, %v2739
        %v2750 = vunpack.c.l.s4 1934713408
        %v2751 = vunpack.c.0.s8 %v2750
        %v2752 = vlaneseq
        %v2753 = vshrl.u32 %v2752, 7
        %v2754 = vsub.s32 %v2751, %v2753
        %v2755 = vrot.slane %v2747, %v2754
        %v2757 = vunpack.c.l.s4 1934713408
        %v2758 = vunpack.c.0.s8 %v2757
        %v2759 = vlaneseq
        %v2760 = vshrl.u32 %v2759, 7
        %v2761 = vsub.s32 %v2758, %v2760
        %v2762 = vrot.slane %v2748, %v2761
        %v2763 = vcombine.low %v2730, %v2746
        %v2764 = vcombine.high %v2730, %v2746
        %v2766 = vunpack.c.l.s4 1934713408
        %v2767 = vunpack.c.0.s8 %v2766
        %v2768 = vlaneseq
        %v2769 = vshrl.u32 %v2768, 7
        %v2770 = vsub.s32 %v2767, %v2769
        %v2771 = vrot.slane %v2763, %v2770
        %v2773 = vunpack.c.l.s4 1934713408
        %v2774 = vunpack.c.0.s8 %v2773
        %v2775 = vlaneseq
        %v2776 = vshrl.u32 %v2775, 7
        %v2777 = vsub.s32 %v2774, %v2776
        %v2778 = vrot.slane %v2764, %v2777
        %v2779 = vcombine.high %v2755, 0.0
        %v2780 = vcombine.high %v2762, 0.0
        %v2781 = vcombine.high %v2771, 0.0
        %v2782 = vcombine.high %v2778, 0.0
        %2784 = vrot.lane.b32.xlu0 %v2779, 16
        %v2785 = vpop.permute.xlu0 %2784
        %2788 = vrot.lane.b32.xlu0 %v2762, 32
        %v2789 = vpop.permute.xlu0 %2788
        %2792 = vrot.lane.b32.xlu0 %v2780, 48
        %v2793 = vpop.permute.xlu0 %2792
        %2796 = vrot.lane.b32.xlu0 %v2771, 64
        %v2797 = vpop.permute.xlu0 %2796
        %2800 = vrot.lane.b32.xlu0 %v2781, 80
        %v2801 = vpop.permute.xlu0 %2800
        %2804 = vrot.lane.b32.xlu0 %v2778, 96
        %v2805 = vpop.permute.xlu0 %2804
        %2808 = vrot.lane.b32.xlu0 %v2782, 112
        %v2809 = vpop.permute.xlu0 %2808
        %v2811 = vsel %vm658, %v2755, %v2785
        %v2812 = vsel %vm660, %v2811, %v2789
        %v2813 = vsel %vm662, %v2812, %v2793
        %v2814 = vsel %vm664, %v2813, %v2797
        %v2815 = vsel %vm666, %v2814, %v2801
        %v2816 = vsel %vm668, %v2815, %v2805
        %v2817 = vsel %vm670, %v2816, %v2809
        %2818 = vrot.lane.b32.xlu0 %v2586, 126
        %v2819 = vpop.permute.xlu0 %2818
        %2820 = vrot.lane.b32.xlu0 %v2589, 126
        %v2821 = vpop.permute.xlu0 %2820
        %2822 = vrot.lane.b32.xlu0 %v2592, 126
        %v2823 = vpop.permute.xlu0 %2822
        %2824 = vrot.lane.b32.xlu0 %v2595, 126
        %v2825 = vpop.permute.xlu0 %2824
        %v2830 = vcombine.low %v2819, %v2823
        %v2831 = vcombine.high %v2819, %v2823
        %v2833 = vunpack.c.l.s4 1983009808
        %v2834 = vunpack.c.0.s8 %v2833
        %v2835 = vlaneseq
        %v2836 = vshrl.u32 %v2835, 7
        %v2837 = vsub.s32 %v2834, %v2836
        %v2838 = vrot.slane %v2830, %v2837
        %v2840 = vunpack.c.l.s4 1983009808
        %v2841 = vunpack.c.0.s8 %v2840
        %v2842 = vlaneseq
        %v2843 = vshrl.u32 %v2842, 7
        %v2844 = vsub.s32 %v2841, %v2843
        %v2845 = vrot.slane %v2831, %v2844
        %v2846 = vcombine.low %v2821, %v2825
        %v2847 = vcombine.high %v2821, %v2825
        %v2849 = vunpack.c.l.s4 1983009808
        %v2850 = vunpack.c.0.s8 %v2849
        %v2851 = vlaneseq
        %v2852 = vshrl.u32 %v2851, 7
        %v2853 = vsub.s32 %v2850, %v2852
        %v2854 = vrot.slane %v2846, %v2853
        %v2856 = vunpack.c.l.s4 1983009808
        %v2857 = vunpack.c.0.s8 %v2856
        %v2858 = vlaneseq
        %v2859 = vshrl.u32 %v2858, 7
        %v2860 = vsub.s32 %v2857, %v2859
        %v2861 = vrot.slane %v2847, %v2860
        %v2862 = vcombine.low %v2838, %v2854
        %v2863 = vcombine.high %v2838, %v2854
        %v2865 = vunpack.c.l.s4 1934713408
        %v2866 = vunpack.c.0.s8 %v2865
        %v2867 = vlaneseq
        %v2868 = vshrl.u32 %v2867, 7
        %v2869 = vsub.s32 %v2866, %v2868
        %v2870 = vrot.slane %v2862, %v2869
        %v2872 = vunpack.c.l.s4 1934713408
        %v2873 = vunpack.c.0.s8 %v2872
        %v2874 = vlaneseq
        %v2875 = vshrl.u32 %v2874, 7
        %v2876 = vsub.s32 %v2873, %v2875
        %v2877 = vrot.slane %v2863, %v2876
        %v2878 = vcombine.low %v2845, %v2861
        %v2879 = vcombine.high %v2845, %v2861
        %v2881 = vunpack.c.l.s4 1934713408
        %v2882 = vunpack.c.0.s8 %v2881
        %v2883 = vlaneseq
        %v2884 = vshrl.u32 %v2883, 7
        %v2885 = vsub.s32 %v2882, %v2884
        %v2886 = vrot.slane %v2878, %v2885
        %v2888 = vunpack.c.l.s4 1934713408
        %v2889 = vunpack.c.0.s8 %v2888
        %v2890 = vlaneseq
        %v2891 = vshrl.u32 %v2890, 7
        %v2892 = vsub.s32 %v2889, %v2891
        %v2893 = vrot.slane %v2879, %v2892
        %v2894 = vcombine.high %v2870, 0.0
        %v2895 = vcombine.high %v2877, 0.0
        %v2896 = vcombine.high %v2886, 0.0
        %v2897 = vcombine.high %v2893, 0.0
        %2899 = vrot.lane.b32.xlu0 %v2894, 16
        %v2900 = vpop.permute.xlu0 %2899
        %2903 = vrot.lane.b32.xlu0 %v2877, 32
        %v2904 = vpop.permute.xlu0 %2903
        %2907 = vrot.lane.b32.xlu0 %v2895, 48
        %v2908 = vpop.permute.xlu0 %2907
        %2911 = vrot.lane.b32.xlu0 %v2886, 64
        %v2912 = vpop.permute.xlu0 %2911
        %2915 = vrot.lane.b32.xlu0 %v2896, 80
        %v2916 = vpop.permute.xlu0 %2915
        %2919 = vrot.lane.b32.xlu0 %v2893, 96
        %v2920 = vpop.permute.xlu0 %2919
        %2923 = vrot.lane.b32.xlu0 %v2897, 112
        %v2924 = vpop.permute.xlu0 %2923
        %v2926 = vsel %vm658, %v2870, %v2900
        %v2927 = vsel %vm660, %v2926, %v2904
        %v2928 = vsel %vm662, %v2927, %v2908
        %v2929 = vsel %vm664, %v2928, %v2912
        %v2930 = vsel %vm666, %v2929, %v2916
        %v2931 = vsel %vm668, %v2930, %v2920
        %v2932 = vsel %vm670, %v2931, %v2924
        %v2933 = vrot.slane %v2235, 2
        %v2934 = vrot.slane %v2236, 2
        %v2935 = vsel %vm1463, %v2933, %v2934
        %v2936 = vrot.slane %v2237, 2
        %v2937 = vrot.slane %v2238, 2
        %v2938 = vsel %vm1463, %v2936, %v2937
        %v2939 = vrot.slane %v2239, 2
        %v2940 = vrot.slane %v2240, 2
        %v2941 = vsel %vm1463, %v2939, %v2940
        %v2942 = vrot.slane %v2241, 2
        %v2943 = vrot.slane %v2242, 2
        %v2944 = vsel %vm1463, %v2942, %v2943
        %v2949 = vcombine.low %v2935, %v2941
        %v2950 = vcombine.high %v2935, %v2941
        %v2952 = vunpack.c.l.s4 1983009808
        %v2953 = vunpack.c.0.s8 %v2952
        %v2954 = vlaneseq
        %v2955 = vshrl.u32 %v2954, 7
        %v2956 = vsub.s32 %v2953, %v2955
        %v2957 = vrot.slane %v2949, %v2956
        %v2959 = vunpack.c.l.s4 1983009808
        %v2960 = vunpack.c.0.s8 %v2959
        %v2961 = vlaneseq
        %v2962 = vshrl.u32 %v2961, 7
        %v2963 = vsub.s32 %v2960, %v2962
        %v2964 = vrot.slane %v2950, %v2963
        %v2965 = vcombine.low %v2938, %v2944
        %v2966 = vcombine.high %v2938, %v2944
        %v2968 = vunpack.c.l.s4 1983009808
        %v2969 = vunpack.c.0.s8 %v2968
        %v2970 = vlaneseq
        %v2971 = vshrl.u32 %v2970, 7
        %v2972 = vsub.s32 %v2969, %v2971
        %v2973 = vrot.slane %v2965, %v2972
        %v2975 = vunpack.c.l.s4 1983009808
        %v2976 = vunpack.c.0.s8 %v2975
        %v2977 = vlaneseq
        %v2978 = vshrl.u32 %v2977, 7
        %v2979 = vsub.s32 %v2976, %v2978
        %v2980 = vrot.slane %v2966, %v2979
        %v2981 = vcombine.low %v2957, %v2973
        %v2982 = vcombine.high %v2957, %v2973
        %v2984 = vunpack.c.l.s4 1934713408
        %v2985 = vunpack.c.0.s8 %v2984
        %v2986 = vlaneseq
        %v2987 = vshrl.u32 %v2986, 7
        %v2988 = vsub.s32 %v2985, %v2987
        %v2989 = vrot.slane %v2981, %v2988
        %v2991 = vunpack.c.l.s4 1934713408
        %v2992 = vunpack.c.0.s8 %v2991
        %v2993 = vlaneseq
        %v2994 = vshrl.u32 %v2993, 7
        %v2995 = vsub.s32 %v2992, %v2994
        %v2996 = vrot.slane %v2982, %v2995
        %v2997 = vcombine.low %v2964, %v2980
        %v2998 = vcombine.high %v2964, %v2980
        %v3000 = vunpack.c.l.s4 1934713408
        %v3001 = vunpack.c.0.s8 %v3000
        %v3002 = vlaneseq
        %v3003 = vshrl.u32 %v3002, 7
        %v3004 = vsub.s32 %v3001, %v3003
        %v3005 = vrot.slane %v2997, %v3004
        %v3007 = vunpack.c.l.s4 1934713408
        %v3008 = vunpack.c.0.s8 %v3007
        %v3009 = vlaneseq
        %v3010 = vshrl.u32 %v3009, 7
        %v3011 = vsub.s32 %v3008, %v3010
        %v3012 = vrot.slane %v2998, %v3011
        %v3013 = vcombine.high %v2989, 0.0
        %v3014 = vcombine.high %v2996, 0.0
        %v3015 = vcombine.high %v3005, 0.0
        %v3016 = vcombine.high %v3012, 0.0
        %3018 = vrot.lane.b32.xlu0 %v3013, 16
        %v3019 = vpop.permute.xlu0 %3018
        %3022 = vrot.lane.b32.xlu0 %v2996, 32
        %v3023 = vpop.permute.xlu0 %3022
        %3026 = vrot.lane.b32.xlu0 %v3014, 48
        %v3027 = vpop.permute.xlu0 %3026
        %3030 = vrot.lane.b32.xlu0 %v3005, 64
        %v3031 = vpop.permute.xlu0 %3030
        %3034 = vrot.lane.b32.xlu0 %v3015, 80
        %v3035 = vpop.permute.xlu0 %3034
        %3038 = vrot.lane.b32.xlu0 %v3012, 96
        %v3039 = vpop.permute.xlu0 %3038
        %3042 = vrot.lane.b32.xlu0 %v3016, 112
        %v3043 = vpop.permute.xlu0 %3042
        %v3045 = vsel %vm658, %v2989, %v3019
        %v3046 = vsel %vm660, %v3045, %v3023
        %v3047 = vsel %vm662, %v3046, %v3027
        %v3048 = vsel %vm664, %v3047, %v3031
        %v3049 = vsel %vm666, %v3048, %v3035
        %v3050 = vsel %vm668, %v3049, %v3039
        %v3051 = vsel %vm670, %v3050, %v3043
        %3052 = vrot.lane.b32.xlu0 %v2935, 127
        %v3053 = vpop.permute.xlu0 %3052
        %3054 = vrot.lane.b32.xlu0 %v2938, 127
        %v3055 = vpop.permute.xlu0 %3054
        %3056 = vrot.lane.b32.xlu0 %v2941, 127
        %v3057 = vpop.permute.xlu0 %3056
        %3058 = vrot.lane.b32.xlu0 %v2944, 127
        %v3059 = vpop.permute.xlu0 %3058
        %v3064 = vcombine.low %v3053, %v3057
        %v3065 = vcombine.high %v3053, %v3057
        %v3067 = vunpack.c.l.s4 1983009808
        %v3068 = vunpack.c.0.s8 %v3067
        %v3069 = vlaneseq
        %v3070 = vshrl.u32 %v3069, 7
        %v3071 = vsub.s32 %v3068, %v3070
        %v3072 = vrot.slane %v3064, %v3071
        %v3074 = vunpack.c.l.s4 1983009808
        %v3075 = vunpack.c.0.s8 %v3074
        %v3076 = vlaneseq
        %v3077 = vshrl.u32 %v3076, 7
        %v3078 = vsub.s32 %v3075, %v3077
        %v3079 = vrot.slane %v3065, %v3078
        %v3080 = vcombine.low %v3055, %v3059
        %v3081 = vcombine.high %v3055, %v3059
        %v3083 = vunpack.c.l.s4 1983009808
        %v3084 = vunpack.c.0.s8 %v3083
        %v3085 = vlaneseq
        %v3086 = vshrl.u32 %v3085, 7
        %v3087 = vsub.s32 %v3084, %v3086
        %v3088 = vrot.slane %v3080, %v3087
        %v3090 = vunpack.c.l.s4 1983009808
        %v3091 = vunpack.c.0.s8 %v3090
        %v3092 = vlaneseq
        %v3093 = vshrl.u32 %v3092, 7
        %v3094 = vsub.s32 %v3091, %v3093
        %v3095 = vrot.slane %v3081, %v3094
        %v3096 = vcombine.low %v3072, %v3088
        %v3097 = vcombine.high %v3072, %v3088
        %v3099 = vunpack.c.l.s4 1934713408
        %v3100 = vunpack.c.0.s8 %v3099
        %v3101 = vlaneseq
        %v3102 = vshrl.u32 %v3101, 7
        %v3103 = vsub.s32 %v3100, %v3102
        %v3104 = vrot.slane %v3096, %v3103
        %v3106 = vunpack.c.l.s4 1934713408
        %v3107 = vunpack.c.0.s8 %v3106
        %v3108 = vlaneseq
        %v3109 = vshrl.u32 %v3108, 7
        %v3110 = vsub.s32 %v3107, %v3109
        %v3111 = vrot.slane %v3097, %v3110
        %v3112 = vcombine.low %v3079, %v3095
        %v3113 = vcombine.high %v3079, %v3095
        %v3115 = vunpack.c.l.s4 1934713408
        %v3116 = vunpack.c.0.s8 %v3115
        %v3117 = vlaneseq
        %v3118 = vshrl.u32 %v3117, 7
        %v3119 = vsub.s32 %v3116, %v3118
        %v3120 = vrot.slane %v3112, %v3119
        %v3122 = vunpack.c.l.s4 1934713408
        %v3123 = vunpack.c.0.s8 %v3122
        %v3124 = vlaneseq
        %v3125 = vshrl.u32 %v3124, 7
        %v3126 = vsub.s32 %v3123, %v3125
        %v3127 = vrot.slane %v3113, %v3126
        %v3128 = vcombine.high %v3104, 0.0
        %v3129 = vcombine.high %v3111, 0.0
        %v3130 = vcombine.high %v3120, 0.0
        %v3131 = vcombine.high %v3127, 0.0
        %3133 = vrot.lane.b32.xlu0 %v3128, 16
        %v3134 = vpop.permute.xlu0 %3133
        %3137 = vrot.lane.b32.xlu0 %v3111, 32
        %v3138 = vpop.permute.xlu0 %3137
        %3141 = vrot.lane.b32.xlu0 %v3129, 48
        %v3142 = vpop.permute.xlu0 %3141
        %3145 = vrot.lane.b32.xlu0 %v3120, 64
        %v3146 = vpop.permute.xlu0 %3145
        %3149 = vrot.lane.b32.xlu0 %v3130, 80
        %v3150 = vpop.permute.xlu0 %3149
        %3153 = vrot.lane.b32.xlu0 %v3127, 96
        %v3154 = vpop.permute.xlu0 %3153
        %3157 = vrot.lane.b32.xlu0 %v3131, 112
        %v3158 = vpop.permute.xlu0 %3157
        %v3160 = vsel %vm658, %v3104, %v3134
        %v3161 = vsel %vm660, %v3160, %v3138
        %v3162 = vsel %vm662, %v3161, %v3142
        %v3163 = vsel %vm664, %v3162, %v3146
        %v3164 = vsel %vm666, %v3163, %v3150
        %v3165 = vsel %vm668, %v3164, %v3154
        %v3166 = vsel %vm670, %v3165, %v3158
        %3167 = vrot.lane.b32.xlu0 %v2935, 126
        %v3168 = vpop.permute.xlu0 %3167
        %3169 = vrot.lane.b32.xlu0 %v2938, 126
        %v3170 = vpop.permute.xlu0 %3169
        %3171 = vrot.lane.b32.xlu0 %v2941, 126
        %v3172 = vpop.permute.xlu0 %3171
        %3173 = vrot.lane.b32.xlu0 %v2944, 126
        %v3174 = vpop.permute.xlu0 %3173
        %v3179 = vcombine.low %v3168, %v3172
        %v3180 = vcombine.high %v3168, %v3172
        %v3182 = vunpack.c.l.s4 1983009808
        %v3183 = vunpack.c.0.s8 %v3182
        %v3184 = vlaneseq
        %v3185 = vshrl.u32 %v3184, 7
        %v3186 = vsub.s32 %v3183, %v3185
        %v3187 = vrot.slane %v3179, %v3186
        %v3189 = vunpack.c.l.s4 1983009808
        %v3190 = vunpack.c.0.s8 %v3189
        %v3191 = vlaneseq
        %v3192 = vshrl.u32 %v3191, 7
        %v3193 = vsub.s32 %v3190, %v3192
        %v3194 = vrot.slane %v3180, %v3193
        %v3195 = vcombine.low %v3170, %v3174
        %v3196 = vcombine.high %v3170, %v3174
        %v3198 = vunpack.c.l.s4 1983009808
        %v3199 = vunpack.c.0.s8 %v3198
        %v3200 = vlaneseq
        %v3201 = vshrl.u32 %v3200, 7
        %v3202 = vsub.s32 %v3199, %v3201
        %v3203 = vrot.slane %v3195, %v3202
        %v3205 = vunpack.c.l.s4 1983009808
        %v3206 = vunpack.c.0.s8 %v3205
        %v3207 = vlaneseq
        %v3208 = vshrl.u32 %v3207, 7
        %v3209 = vsub.s32 %v3206, %v3208
        %v3210 = vrot.slane %v3196, %v3209
        %v3211 = vcombine.low %v3187, %v3203
        %v3212 = vcombine.high %v3187, %v3203
        %v3214 = vunpack.c.l.s4 1934713408
        %v3215 = vunpack.c.0.s8 %v3214
        %v3216 = vlaneseq
        %v3217 = vshrl.u32 %v3216, 7
        %v3218 = vsub.s32 %v3215, %v3217
        %v3219 = vrot.slane %v3211, %v3218
        %v3221 = vunpack.c.l.s4 1934713408
        %v3222 = vunpack.c.0.s8 %v3221
        %v3223 = vlaneseq
        %v3224 = vshrl.u32 %v3223, 7
        %v3225 = vsub.s32 %v3222, %v3224
        %v3226 = vrot.slane %v3212, %v3225
        %v3227 = vcombine.low %v3194, %v3210
        %v3228 = vcombine.high %v3194, %v3210
        %v3230 = vunpack.c.l.s4 1934713408
        %v3231 = vunpack.c.0.s8 %v3230
        %v3232 = vlaneseq
        %v3233 = vshrl.u32 %v3232, 7
        %v3234 = vsub.s32 %v3231, %v3233
        %v3235 = vrot.slane %v3227, %v3234
        %v3237 = vunpack.c.l.s4 1934713408
        %v3238 = vunpack.c.0.s8 %v3237
        %v3239 = vlaneseq
        %v3240 = vshrl.u32 %v3239, 7
        %v3241 = vsub.s32 %v3238, %v3240
        %v3242 = vrot.slane %v3228, %v3241
        %v3243 = vcombine.high %v3219, 0.0
        %v3244 = vcombine.high %v3226, 0.0
        %v3245 = vcombine.high %v3235, 0.0
        %v3246 = vcombine.high %v3242, 0.0
        %3248 = vrot.lane.b32.xlu0 %v3243, 16
        %v3249 = vpop.permute.xlu0 %3248
        %3252 = vrot.lane.b32.xlu0 %v3226, 32
        %v3253 = vpop.permute.xlu0 %3252
        %3256 = vrot.lane.b32.xlu0 %v3244, 48
        %v3257 = vpop.permute.xlu0 %3256
        %3260 = vrot.lane.b32.xlu0 %v3235, 64
        %v3261 = vpop.permute.xlu0 %3260
        %3264 = vrot.lane.b32.xlu0 %v3245, 80
        %v3265 = vpop.permute.xlu0 %3264
        %3268 = vrot.lane.b32.xlu0 %v3242, 96
        %v3269 = vpop.permute.xlu0 %3268
        %3272 = vrot.lane.b32.xlu0 %v3246, 112
        %v3273 = vpop.permute.xlu0 %3272
        %v3275 = vsel %vm658, %v3219, %v3249
        %v3276 = vsel %vm660, %v3275, %v3253
        %v3277 = vsel %vm662, %v3276, %v3257
        %v3278 = vsel %vm664, %v3277, %v3261
        %v3279 = vsel %vm666, %v3278, %v3265
        %v3280 = vsel %vm668, %v3279, %v3269
        %v3281 = vsel %vm670, %v3280, %v3273
        %v3283 = vrot.slane %v2464, 4
        %v3286 = vrot.slane %v2702, 4
        %v3289 = vrot.slane %v2932, 4
        %v3292 = vrot.slane %v3166, 4
        %v3294 = vsel %vm1955, %v2345, %v3283
        %v3295 = vsel %vm1955, %v2579, %v3286
        %v3296 = vsel %vm1955, %v2817, %v3289
        %v3297 = vsel %vm1955, %v3051, %v3292
        %v3298 = vld [vmem:[%s5] sm:$0x3]
        %v3299 = vpack.c.bf16 %v3295, %v3294
        %v3300 = vpack.c.bf16 %v3297, %v3296
        %v3301 = vpack.c.bf16 %v3281, %v3281
        %v3302 = vld [vmem:[%s6] sm:$0xf]
        %3304 = vset.pattern.permute.xlu0 0
        %3305 = vperm.xlu0 %3304, %v3302
        %v3306 = vpop.permute.xlu0 %3305
        %v3309 = vsel %vm1977, %v3298, 0
        %v3312 = vsel %vm474, %v3301, 0
        %3314 = vmatprep.subr.bf16.mxu0 0
        %3315 = vmatpush1.bf16.msra.mxu0 %v3299
        %3316 = vmatprep.subr.bf16.mxu0 0
        %3317 = vmatpush1.bf16.msra.mxu0 %v3300
        %3318 = vmatprep.subr.bf16.mxu0 0
        %3319 = vmatpush1.bf16.msra.mxu0 %v3312
        %3320 = vmatprep.subr.bf16.mxu0 0
        %3321 = vmatpush1.bf16.msra.mxu0 0
        %3322 = vmatprep.subr.bf16.mxu0 0
        %3323 = vmatpush1.bf16.msra.mxu0 0
        %3324 = vmatprep.subr.bf16.mxu0 0
        %3325 = vmatpush1.bf16.msra.mxu0 0
        %3326 = vmatprep.subr.bf16.mxu0 0
        %3327 = vmatpush1.bf16.msra.mxu0 0
        %3328 = vmatprep.subr.bf16.mxu0 0
        %3329 = vmatpush1.bf16.msra.mxu0 0
        %3330 = vmatprep.subr.bf16.mxu0 0
        %3331 = vmatpush1.bf16.msra.mxu0 0
        %3332 = vmatprep.subr.bf16.mxu0 0
        %3333 = vmatpush1.bf16.msra.mxu0 0
        %3334 = vmatprep.subr.bf16.mxu0 0
        %3335 = vmatpush1.bf16.msra.mxu0 0
        %3336 = vmatprep.subr.bf16.mxu0 0
        %3337 = vmatpush1.bf16.msra.mxu0 0
        %3338 = vmatprep.subr.bf16.mxu0 0
        %3339 = vmatpush1.bf16.msra.mxu0 0
        %3340 = vmatprep.subr.bf16.mxu0 0
        %3341 = vmatpush1.bf16.msra.mxu0 0
        %3342 = vmatprep.subr.bf16.mxu0 0
        %3343 = vmatpush1.bf16.msra.mxu0 0
        %3344 = vmatprep.subr.bf16.mxu0 0
        %3345 = vmatpush1.bf16.msra.mxu0 0
        %3346 = vmatprep.mubr.bf16.mxu0 0
        %3347 = vmatmul.mubr.bf16.gmra.mrb[0].mxu0 %v3309
        %v3348 = vpop.f32.mrb[0].mxu0
        %v3349 = vadd.f32 %v3306, %v3348
        %v3350 = vpop.f32.mrb[0].mxu0
        %v3351 = vpop.f32.mrb[0].mxu0
        %v3352 = vpop.f32.mrb[0].mxu0
        %3353 = vdwg.mxu0
        %v3354 = vcombine.low %v422, %v424
        %v3355 = vcombine.high %v422, %v424
        %v3357 = vunpack.c.l.s4 1983009808
        %v3358 = vunpack.c.0.s8 %v3357
        %v3359 = vlaneseq
        %v3360 = vshrl.u32 %v3359, 7
        %v3361 = vsub.s32 %v3358, %v3360
        %v3362 = vrot.slane %v3354, %v3361
        %v3364 = vunpack.c.l.s4 1983009808
        %v3365 = vunpack.c.0.s8 %v3364
        %v3366 = vlaneseq
        %v3367 = vshrl.u32 %v3366, 7
        %v3368 = vsub.s32 %v3365, %v3367
        %v3369 = vrot.slane %v3355, %v3368
        %v3370 = vcombine.low %v423, %v425
        %v3371 = vcombine.high %v423, %v425
        %v3373 = vunpack.c.l.s4 1983009808
        %v3374 = vunpack.c.0.s8 %v3373
        %v3375 = vlaneseq
        %v3376 = vshrl.u32 %v3375, 7
        %v3377 = vsub.s32 %v3374, %v3376
        %v3378 = vrot.slane %v3370, %v3377
        %v3380 = vunpack.c.l.s4 1983009808
        %v3381 = vunpack.c.0.s8 %v3380
        %v3382 = vlaneseq
        %v3383 = vshrl.u32 %v3382, 7
        %v3384 = vsub.s32 %v3381, %v3383
        %v3385 = vrot.slane %v3371, %v3384
        %v3386 = vcombine.low %v3362, %v3378
        %v3387 = vcombine.high %v3362, %v3378
        %v3389 = vunpack.c.l.s4 1934713408
        %v3390 = vunpack.c.0.s8 %v3389
        %v3391 = vlaneseq
        %v3392 = vshrl.u32 %v3391, 7
        %v3393 = vsub.s32 %v3390, %v3392
        %v3394 = vrot.slane %v3386, %v3393
        %v3396 = vunpack.c.l.s4 1934713408
        %v3397 = vunpack.c.0.s8 %v3396
        %v3398 = vlaneseq
        %v3399 = vshrl.u32 %v3398, 7
        %v3400 = vsub.s32 %v3397, %v3399
        %v3401 = vrot.slane %v3387, %v3400
        %v3402 = vcombine.low %v3369, %v3385
        %v3403 = vcombine.high %v3369, %v3385
        %v3405 = vunpack.c.l.s4 1934713408
        %v3406 = vunpack.c.0.s8 %v3405
        %v3407 = vlaneseq
        %v3408 = vshrl.u32 %v3407, 7
        %v3409 = vsub.s32 %v3406, %v3408
        %v3410 = vrot.slane %v3402, %v3409
        %v3412 = vunpack.c.l.s4 1934713408
        %v3413 = vunpack.c.0.s8 %v3412
        %v3414 = vlaneseq
        %v3415 = vshrl.u32 %v3414, 7
        %v3416 = vsub.s32 %v3413, %v3415
        %v3417 = vrot.slane %v3403, %v3416
        %v3418 = vcombine.high %v3394, 0.0
        %v3419 = vcombine.high %v3401, 0.0
        %v3420 = vcombine.high %v3410, 0.0
        %v3421 = vcombine.high %v3417, 0.0
        %3423 = vrot.lane.b32.xlu0 %v3418, 16
        %v3424 = vpop.permute.xlu0 %3423
        %3427 = vrot.lane.b32.xlu0 %v3401, 32
        %v3428 = vpop.permute.xlu0 %3427
        %3431 = vrot.lane.b32.xlu0 %v3419, 48
        %v3432 = vpop.permute.xlu0 %3431
        %3435 = vrot.lane.b32.xlu0 %v3410, 64
        %v3436 = vpop.permute.xlu0 %3435
        %3439 = vrot.lane.b32.xlu0 %v3420, 80
        %v3440 = vpop.permute.xlu0 %3439
        %3443 = vrot.lane.b32.xlu0 %v3417, 96
        %v3444 = vpop.permute.xlu0 %3443
        %3447 = vrot.lane.b32.xlu0 %v3421, 112
        %v3448 = vpop.permute.xlu0 %3447
        %v3450 = vsel %vm658, %v3394, %v3424
        %v3451 = vsel %vm660, %v3450, %v3428
        %v3452 = vsel %vm662, %v3451, %v3432
        %v3453 = vsel %vm664, %v3452, %v3436
        %v3454 = vsel %vm666, %v3453, %v3440
        %v3455 = vsel %vm668, %v3454, %v3444
        %v3456 = vsel %vm670, %v3455, %v3448
        %v3457 = vadd.f32 %v3349, %v3456
        %3458 = vst [vmem:[%s414] sm:$0xf] %v3457
        %s3459 = sand.u32 %s229, 1
        %s3460 = scalar_lea.sflag [#allocation4], %s3459
        %s3461 = sand.u32 %s229, 1
        %s3462 = smul.addr %s3461, 4
        %s3463 = scalar_lea.vmem [#allocation8], %s3462
        // Predicated region
        $region61: #{tpu_custom_call.1} parent=47 // pred_check
          %p3464 = pneg %p239
        $region62: #{tpu_custom_call.1} parent=47 // pred_check_branch
          %3466 = sbr.rel (%p3464) target = $region64
        $region63: #{tpu_custom_call.1} parent=47 // pred_region
          %s3468 = ssub.s32 64, 64
          %3469 = vsyncadd %s3460, %s3468
          %s3470 = smul.addr %s31, 2
          %s3471 = sadd.s32 %s32, %s3470
          %s3472 = smul.addr %s3471, 64
          %s3473 = scalar_lea.hbm %s7, %s3472
          %s3475 = sshll.u32 %s3463, 4
          %s3476 = int_to_ptr.vmem [resolvable:$true] %s3475
          %3478 = dma.vmem_to_hbm [thread:$0]  %s3476, 64, %s3473, %s3460
        $region64: #{tpu_custom_call.1} parent=47 // pred_fallthru
          _
      $region48: #{tpu_custom_call.1} parent=5 // pred_fallthru
        _
      %p3479 = scmp.le.s32.totalorder 2, %s22
      // Predicated region
      $region65: #{tpu_custom_call.1} parent=5 // pred_check
        %p3480 = pneg %p3479
      $region66: #{tpu_custom_call.1} parent=5 // pred_check_branch
        %3482 = sbr.rel (%p3480) target = $region68
      $region67: #{tpu_custom_call.1} parent=5 // pred_region
        %s3483 = ssub.s32 %s22, 2
        // Predicated region
        $region69: #{tpu_custom_call.1} parent=67 // pred_check
          %p3484 = pneg %p245
        $region70: #{tpu_custom_call.1} parent=67 // pred_check_branch
          %3486 = sbr.rel (%p3484) target = $region72
        $region71: #{tpu_custom_call.1} parent=67 // pred_region
          %s3487 = sand.u32 %s230, 1
          %s3488 = scalar_lea.sflag [#allocation4], %s3487
          %s3489 = sand.u32 %s230, 1
          %s3490 = smul.addr %s3489, 4
          %s3491 = scalar_lea.vmem [#allocation8], %s3490
          %3492 = dma.done %s3488, 64
        $region72: #{tpu_custom_call.1} parent=67 // pred_fallthru
          _
      $region68: #{tpu_custom_call.1} parent=5 // pred_fallthru
        _
    $region6: #{tpu_custom_call.1} parent=1 // loop_footer
      %s26 = sadd.s32 1, %s22
    $region7: #{tpu_custom_call.1} parent=1 // loop_footer_branch
      %21 = sbr.rel target = $region3
    $region8: #{tpu_custom_call.1} parent=1 // loop_exit
      _
    %3493 = vsyncpa [#allocation3], 1
    %s3494 = scalar_lea.sflag [#allocation3], 1
    %3495 = vsyncpa %s3494, 1
    %3496 = vsyncpa [#allocation6], 1
    %s3497 = scalar_lea.sflag [#allocation6], 1
    %3498 = vsyncpa %s3497, 1
    %3499 = vsyncpa [#allocation4], 1
    %s3500 = scalar_lea.sflag [#allocation4], 1
    %3501 = vsyncpa %s3500, 1

</llo_original>
